<compile_context>
chip_gen: v7x
topology: tpu7x:2x2x1
jax: 0.10.0
libtpu: 0.0.40
codegen_flags: <defaults>
</compile_context>

<pallas_src>
import functools
import math

import jax
import jax.numpy as jnp
from jax.experimental import pallas as pl
from jax.experimental.pallas import tpu as pltpu

LN_EPS = 1e-5  # torch.nn.LayerNorm default


def _layer_norm(x, gamma, beta):
    # x: (S, D), gamma/beta: (1, D); statistics in f32
    mean = jnp.mean(x, axis=-1, keepdims=True)
    var = jnp.mean(jnp.square(x - mean), axis=-1, keepdims=True)
    return (x - mean) * jax.lax.rsqrt(var + LN_EPS) * gamma + beta


def fused_encoder_kernel(x_ref, mask_ref,
                         ln1_g_ref, ln1_b_ref,
                         wq_ref, bq_ref, wk_ref, bk_ref,
                         wv_ref, bv_ref, wo_ref, bo_ref,
                         ln2_g_ref, ln2_b_ref,
                         w1_ref, b1_ref, w2_ref, b2_ref,
                         fin_g_ref, fin_b_ref,
                         o_ref, x_scr, *, h):
    """Grid = (batch, layer).  One grid step = one encoder layer for one batch
    element; activations live in the f32 VMEM scratch across the layer axis."""
    layer = pl.program_id(1)
    n_layers = pl.num_programs(1)

    # Load this batch's activations into the resident scratch at layer 0.
    @pl.when(layer == 0)
    def _():
        x_scr[...] = x_ref[0].astype(jnp.float32)

    x = x_scr[...]                                    # (S, D) f32 residual stream
    S, D = x.shape
    d_k = D // h
    inv_sqrt_dk = jnp.float32(1.0 / math.sqrt(d_k))

    # Additive attention-mask bias, computed once per grid step: (1, S)
    bias = jnp.where(mask_ref[0] == 0.0, jnp.float32(-1e9), jnp.float32(0.0))

    # ---------------- sublayer 1: x + MHA(LayerNorm(x)) ----------------
    xn = _layer_norm(x, ln1_g_ref[0], ln1_b_ref[0]).astype(jnp.bfloat16)

    q = jnp.dot(xn, wq_ref[0], preferred_element_type=jnp.float32) + bq_ref[0]
    k = jnp.dot(xn, wk_ref[0], preferred_element_type=jnp.float32) + bk_ref[0]
    v = jnp.dot(xn, wv_ref[0], preferred_element_type=jnp.float32) + bv_ref[0]

    # (S, D) -> (h, S, d_k): heads become the leading (batch) matmul dimension.
    qh = q.reshape(S, h, d_k).transpose(1, 0, 2).astype(jnp.bfloat16)
    kh = k.reshape(S, h, d_k).transpose(1, 0, 2).astype(jnp.bfloat16)
    vh = v.reshape(S, h, d_k).transpose(1, 0, 2).astype(jnp.bfloat16)

    # Batched scores over heads, contracting d_k directly (no explicit .T).
    sc = jnp.einsum('hqd,hkd->hqk', qh, kh,
                    preferred_element_type=jnp.float32) * inv_sqrt_dk
    sc = sc + bias                                    # broadcast: heads & query rows
    sc = sc - jnp.max(sc, axis=-1, keepdims=True)     # f32 softmax stats
    p = jnp.exp(sc)
    p = p * pl.reciprocal(jnp.sum(p, axis=-1, keepdims=True), approx=True)

    ctx = jnp.einsum('hqk,hkd->hqd', p.astype(jnp.bfloat16), vh,
                     preferred_element_type=jnp.float32)          # (h, S, d_k)
    attn = ctx.transpose(1, 0, 2).reshape(S, D).astype(jnp.bfloat16)
    attn = jnp.dot(attn, wo_ref[0], preferred_element_type=jnp.float32) + bo_ref[0]

    x = x + attn                                      # dropout == identity (eval)

    # ---------------- sublayer 2: x + FFN(LayerNorm(x)) ----------------
    xn2 = _layer_norm(x, ln2_g_ref[0], ln2_b_ref[0]).astype(jnp.bfloat16)
    mid = jnp.dot(xn2, w1_ref[0], preferred_element_type=jnp.float32) + b1_ref[0]
    mid = jnp.maximum(mid, 0.0).astype(jnp.bfloat16)
    ff = jnp.dot(mid, w2_ref[0], preferred_element_type=jnp.float32) + b2_ref[0]
    x = x + ff

    x_scr[...] = x

    # Final LayerNorm fused after the last layer: single HBM writeback.
    @pl.when(layer == n_layers - 1)
    def _():
        o_ref[0] = _layer_norm(x, fin_g_ref[...], fin_b_ref[...]).astype(o_ref.dtype)


def encoder_forward(x, mask, params, final_g, final_b, h):
    """x: (B, S, D) f32, mask: (B, 1, S) with 1.0 = attend, 0.0 = masked."""
    B, S, D = x.shape
    N = params["wq"].shape[0]
    F = params["w1"].shape[2]
    d_k = D // h

    bf16 = jnp.bfloat16
    wq = params["wq"].astype(bf16)
    wk = params["wk"].astype(bf16)
    wv = params["wv"].astype(bf16)
    wo = params["wo"].astype(bf16)
    w1 = params["w1"].astype(bf16)
    w2 = params["w2"].astype(bf16)

    def _layer_spec(*dims):
        nz = len(dims)
        return pl.BlockSpec((1,) + dims, lambda b, l, _nz=nz: (l,) + (0,) * _nz)

    def _const_spec(*dims):
        nz = len(dims)
        return pl.BlockSpec(dims, lambda b, l, _nz=nz: (0,) * _nz)

    in_specs = [
        pl.BlockSpec((1, S, D), lambda b, l: (b, 0, 0)),   # x
        pl.BlockSpec((1, 1, S), lambda b, l: (b, 0, 0)),   # mask
        _layer_spec(1, D), _layer_spec(1, D),              # ln1 gamma/beta
        _layer_spec(D, D), _layer_spec(1, D),              # Wq, bq
        _layer_spec(D, D), _layer_spec(1, D),              # Wk, bk
        _layer_spec(D, D), _layer_spec(1, D),              # Wv, bv
        _layer_spec(D, D), _layer_spec(1, D),              # Wo, bo
        _layer_spec(1, D), _layer_spec(1, D),              # ln2 gamma/beta
        _layer_spec(D, F), _layer_spec(1, F),              # W1, b1
        _layer_spec(F, D), _layer_spec(1, D),              # W2, b2
        _const_spec(1, D), _const_spec(1, D),              # final LN gamma/beta
    ]

    # --- cost estimate (advisory) ---
    flops_proj = 2 * S * D * D * 4                       # q/k/v/o projections
    flops_attn = 2 * (2 * h * S * S * d_k)               # scores + context
    flops_ffn = 2 * (2 * S * D * F)                      # W1 + W2
    flops = B * N * (flops_proj + flops_attn + flops_ffn)
    transcendentals = B * N * h * S * S                  # softmax exp
    weight_slab_bytes = (4 * D * D + 2 * D * F) * 2 + (6 * D + F) * 4
    bytes_accessed = B * N * weight_slab_bytes + 2 * B * S * D * 4 + B * S * 4

    # --- explicit VMEM budget: double-buffered weight slabs + act blocks + scratch ---
    per_step_bytes = (2 * weight_slab_bytes              # double-buffered layer params
                      + 2 * 2 * S * D * 4                # x block + out block (dbl-buf)
                      + S * D * 4                        # resident f32 scratch
                      + 2 * S * 4)                       # mask
    vmem_limit = int(min(64 * 2 ** 20, max(16 * 2 ** 20, 4 * per_step_bytes)))

    kernel = functools.partial(fused_encoder_kernel, h=h)
    return pl.pallas_call(
        kernel,
        out_shape=jax.ShapeDtypeStruct((B, S, D), x.dtype),
        grid=(B, N),
        in_specs=in_specs,
        out_specs=pl.BlockSpec((1, S, D), lambda b, l: (b, 0, 0)),
        scratch_shapes=[pltpu.VMEM((S, D), jnp.float32)],
        compiler_params=pltpu.CompilerParams(
            dimension_semantics=("parallel", "arbitrary"),
            vmem_limit_bytes=vmem_limit),
        cost_estimate=pl.CostEstimate(
            flops=int(flops),
            transcendentals=int(transcendentals),
            bytes_accessed=int(bytes_accessed)),
    )(x, mask,
      params["ln1_g"], params["ln1_b"],
      wq, params["bq"], wk, params["bk"],
      wv, params["bv"], wo, params["bo"],
      params["ln2_g"], params["ln2_b"],
      w1, params["b1"], w2, params["b2"],
      final_g, final_b)


def init_encoder_params(key, d_model, d_ff, h, N):
    """Per-layer parameters stacked along a leading (N, ...) axis."""
    assert d_model % h == 0
    ks = jax.random.split(key, 12)
    s_dm = 1.0 / math.sqrt(d_model)
    s_ff = 1.0 / math.sqrt(d_ff)
    u = lambda k, shape, s: jax.random.uniform(k, shape, jnp.float32, -s, s)
    params = dict(
        ln1_g=jnp.ones((N, 1, d_model), jnp.float32),
        ln1_b=jnp.zeros((N, 1, d_model), jnp.float32),
        wq=u(ks[0], (N, d_model, d_model), s_dm),
        bq=u(ks[1], (N, 1, d_model), s_dm),
        wk=u(ks[2], (N, d_model, d_model), s_dm),
        bk=u(ks[3], (N, 1, d_model), s_dm),
        wv=u(ks[4], (N, d_model, d_model), s_dm),
        bv=u(ks[5], (N, 1, d_model), s_dm),
        wo=u(ks[6], (N, d_model, d_model), s_dm),
        bo=u(ks[7], (N, 1, d_model), s_dm),
        ln2_g=jnp.ones((N, 1, d_model), jnp.float32),
        ln2_b=jnp.zeros((N, 1, d_model), jnp.float32),
        w1=u(ks[8], (N, d_model, d_ff), s_dm),
        b1=u(ks[9], (N, 1, d_ff), s_dm),
        w2=u(ks[10], (N, d_ff, d_model), s_ff),
        b2=u(ks[11], (N, 1, d_model), s_ff),
    )
    final_g = jnp.ones((1, d_model), jnp.float32)
    final_b = jnp.zeros((1, d_model), jnp.float32)
    return params, final_g, final_b


def encoder_reference(x, mask, params, final_g, final_b, h):
    """Pure-JAX f32 reference matching the PyTorch Encoder (eval mode)."""
    B, S, D = x.shape
    N = params["wq"].shape[0]
    d_k = D // h

    def ln(z, g, b):
        m = jnp.mean(z, axis=-1, keepdims=True)
        v = jnp.mean(jnp.square(z - m), axis=-1, keepdims=True)
        return (z - m) * jax.lax.rsqrt(v + LN_EPS) * g + b

    for i in range(N):
        xn = ln(x, params["ln1_g"][i], params["ln1_b"][i])
        q = xn @ params["wq"][i] + params["bq"][i]
        k = xn @ params["wk"][i] + params["bk"][i]
        v = xn @ params["wv"][i] + params["bv"][i]
        q = q.reshape(B, S, h, d_k).transpose(0, 2, 1, 3)
        k = k.reshape(B, S, h, d_k).transpose(0, 2, 1, 3)
        v = v.reshape(B, S, h, d_k).transpose(0, 2, 1, 3)
        sc = (q @ k.transpose(0, 1, 3, 2)) / math.sqrt(d_k)
        m4 = mask[:, None, :, :]                       # (B, 1, 1, S)
        sc = jnp.where(m4 == 0.0, jnp.float32(-1e9), sc)
        p = jax.nn.softmax(sc, axis=-1)
        ctx = (p @ v).transpose(0, 2, 1, 3).reshape(B, S, D)
        x = x + (ctx @ params["wo"][i] + params["bo"][i])
        xn2 = ln(x, params["ln2_g"][i], params["ln2_b"][i])
        mid = jax.nn.relu(xn2 @ params["w1"][i] + params["b1"][i])
        x = x + (mid @ params["w2"][i] + params["b2"][i])
    return ln(x, final_g, final_b)


if __name__ == "__main__":
    B, S = 2, 8
    d_model, d_ff, h, N = 32, 64, 4, 2

    key = jax.random.PRNGKey(0)
    k_x, k_p = jax.random.split(key)

    x = jax.random.normal(k_x, (B, S, d_model), jnp.float32)
    mask = jnp.ones((B, 1, S), jnp.float32)
    mask = mask.at[1, 0, 6:].set(0.0)   # mask out last 2 key positions of batch 1

    params, final_g, final_b = init_encoder_params(k_p, d_model, d_ff, h, N)

    out = encoder_forward(x, mask, params, final_g, final_b, h)
    out = jax.block_until_ready(out)

    assert out.shape == (B, S, d_model)
    assert bool(jnp.all(jnp.isfinite(out)))

    ref = encoder_reference(x, mask, params, final_g, final_b, h)
    max_err = float(jnp.max(jnp.abs(out - ref)))
    assert max_err < 5e-2, f"max abs error vs f32 reference: {max_err}"
    print("KERNEL_OK")
</pallas_src>

<mosaic_0001>
module attributes {stable_mosaic.version = 11 : i64} {
  func.func @fused_encoder_kernel(%arg0: i32, %arg1: i32, %arg2: memref<1x8x32xf32, #tpu.memory_space<vmem>>, %arg3: memref<1x1x8xf32, #tpu.memory_space<vmem>>, %arg4: memref<1x1x32xf32, #tpu.memory_space<vmem>>, %arg5: memref<1x1x32xf32, #tpu.memory_space<vmem>>, %arg6: memref<1x32x32xbf16, #tpu.memory_space<vmem>>, %arg7: memref<1x1x32xf32, #tpu.memory_space<vmem>>, %arg8: memref<1x32x32xbf16, #tpu.memory_space<vmem>>, %arg9: memref<1x1x32xf32, #tpu.memory_space<vmem>>, %arg10: memref<1x32x32xbf16, #tpu.memory_space<vmem>>, %arg11: memref<1x1x32xf32, #tpu.memory_space<vmem>>, %arg12: memref<1x32x32xbf16, #tpu.memory_space<vmem>>, %arg13: memref<1x1x32xf32, #tpu.memory_space<vmem>>, %arg14: memref<1x1x32xf32, #tpu.memory_space<vmem>>, %arg15: memref<1x1x32xf32, #tpu.memory_space<vmem>>, %arg16: memref<1x32x64xbf16, #tpu.memory_space<vmem>>, %arg17: memref<1x1x64xf32, #tpu.memory_space<vmem>>, %arg18: memref<1x64x32xbf16, #tpu.memory_space<vmem>>, %arg19: memref<1x1x32xf32, #tpu.memory_space<vmem>>, %arg20: memref<1x32xf32, #tpu.memory_space<vmem>>, %arg21: memref<1x32xf32, #tpu.memory_space<vmem>>, %arg22: memref<1x8x32xf32, #tpu.memory_space<vmem>>, %arg23: memref<8x32xf32, #tpu.memory_space<vmem>>) attributes {dimension_semantics = [#tpu.dimension_semantics<parallel>, #tpu.dimension_semantics<arbitrary>], iteration_bounds = array<i64: 2, 2>, scalar_prefetch = 0 : i64, scratch_operands = 1 : i64, tpu.core_type = #tpu.core_type<tc>, window_params = [{transform_indices = @transform_0, window_bounds = array<i64: 1, 8, 32>}, {transform_indices = @transform_1, window_bounds = array<i64: 1, 1, 8>}, {transform_indices = @transform_2, window_bounds = array<i64: 1, 1, 32>}, {transform_indices = @transform_3, window_bounds = array<i64: 1, 1, 32>}, {transform_indices = @transform_4, window_bounds = array<i64: 1, 32, 32>}, {transform_indices = @transform_5, window_bounds = array<i64: 1, 1, 32>}, {transform_indices = @transform_6, window_bounds = array<i64: 1, 32, 32>}, {transform_indices = @transform_7, window_bounds = array<i64: 1, 1, 32>}, {transform_indices = @transform_8, window_bounds = array<i64: 1, 32, 32>}, {transform_indices = @transform_9, window_bounds = array<i64: 1, 1, 32>}, {transform_indices = @transform_10, window_bounds = array<i64: 1, 32, 32>}, {transform_indices = @transform_11, window_bounds = array<i64: 1, 1, 32>}, {transform_indices = @transform_12, window_bounds = array<i64: 1, 1, 32>}, {transform_indices = @transform_13, window_bounds = array<i64: 1, 1, 32>}, {transform_indices = @transform_14, window_bounds = array<i64: 1, 32, 64>}, {transform_indices = @transform_15, window_bounds = array<i64: 1, 1, 64>}, {transform_indices = @transform_16, window_bounds = array<i64: 1, 64, 32>}, {transform_indices = @transform_17, window_bounds = array<i64: 1, 1, 32>}, {pipeline_mode = #tpu.pipeline_mode<synchronous>, transform_indices = @transform_18, window_bounds = array<i64: 1, 32>}, {pipeline_mode = #tpu.pipeline_mode<synchronous>, transform_indices = @transform_19, window_bounds = array<i64: 1, 32>}, {transform_indices = @transform_20, window_bounds = array<i64: 1, 8, 32>}]} {
    %c0_i32 = arith.constant 0 : i32
    %0 = arith.cmpi eq, %arg1, %c0_i32 : i32
    %1 = arith.extui %0 : i1 to i32
    %c0_i32_0 = arith.constant 0 : i32
    %2 = arith.cmpi ne, %1, %c0_i32_0 : i32
    scf.if %2 {
      %c0_80 = arith.constant 0 : index
      %c0_81 = arith.constant 0 : index
      %c0_82 = arith.constant 0 : index
      %146 = vector.load %arg2[%c0_80, %c0_81, %c0_82] : memref<1x8x32xf32, #tpu.memory_space<vmem>>, vector<1x8x32xf32>
      %147 = vector.shape_cast %146 : vector<1x8x32xf32> to vector<8x32xf32>
      %c0_83 = arith.constant 0 : index
      %c0_84 = arith.constant 0 : index
      %148 = vector.load %arg23[%c0_83, %c0_84] : memref<8x32xf32, #tpu.memory_space<vmem>>, vector<8x32xf32>
      tpu.vector_store %arg23[%c0_83, %c0_84], %147 {strides = array<i32>} : memref<8x32xf32, #tpu.memory_space<vmem>>, vector<8x32xf32>,
    } else {
    }
    %c0 = arith.constant 0 : index
    %c0_1 = arith.constant 0 : index
    %3 = vector.load %arg23[%c0, %c0_1] : memref<8x32xf32, #tpu.memory_space<vmem>>, vector<8x32xf32>
    %c0_2 = arith.constant 0 : index
    %c0_3 = arith.constant 0 : index
    %c0_4 = arith.constant 0 : index
    %4 = vector.load %arg3[%c0_2, %c0_3, %c0_4] : memref<1x1x8xf32, #tpu.memory_space<vmem>>, vector<1x1x8xf32>
    %5 = vector.shape_cast %4 : vector<1x1x8xf32> to vector<1x8xf32>
    %cst = arith.constant 0.000000e+00 : f32
    %6 = vector.broadcast %cst : f32 to vector<1x8xf32>
    %7 = arith.cmpf oeq, %5, %6 : vector<1x8xf32>
    %cst_5 = arith.constant -1.000000e+09 : f32
    %cst_6 = arith.constant 0.000000e+00 : f32
    %8 = vector.broadcast %cst_5 : f32 to vector<1x8xf32>
    %9 = vector.broadcast %cst_6 : f32 to vector<1x8xf32>
    %10 = arith.select %7, %8, %9 : vector<1x8xi1>, vector<1x8xf32>
    %c0_7 = arith.constant 0 : index
    %c0_8 = arith.constant 0 : index
    %c0_9 = arith.constant 0 : index
    %11 = vector.load %arg4[%c0_7, %c0_8, %c0_9] : memref<1x1x32xf32, #tpu.memory_space<vmem>>, vector<1x1x32xf32>
    %12 = vector.shape_cast %11 : vector<1x1x32xf32> to vector<1x32xf32>
    %c0_10 = arith.constant 0 : index
    %c0_11 = arith.constant 0 : index
    %c0_12 = arith.constant 0 : index
    %13 = vector.load %arg5[%c0_10, %c0_11, %c0_12] : memref<1x1x32xf32, #tpu.memory_space<vmem>>, vector<1x1x32xf32>
    %14 = vector.shape_cast %13 : vector<1x1x32xf32> to vector<1x32xf32>
    %cst_13 = arith.constant dense<0.000000e+00> : vector<8xf32>
    %15 = vector.multi_reduction <add>, %3, %cst_13 [1] : vector<8x32xf32> to vector<8xf32>
    %16 = vector.shape_cast %15 : vector<8xf32> to vector<8x1xf32>
    %cst_14 = arith.constant 3.200000e+01 : f32
    %17 = vector.broadcast %cst_14 : f32 to vector<8x1xf32>
    %18 = arith.divf %16, %17 : vector<8x1xf32>
    %19 = vector.broadcast %18 : vector<8x1xf32> to vector<8x32xf32>
    %20 = arith.subf %3, %19 : vector<8x32xf32>
    %21 = arith.mulf %20, %20 : vector<8x32xf32>
    %cst_15 = arith.constant dense<0.000000e+00> : vector<8xf32>
    %22 = vector.multi_reduction <add>, %21, %cst_15 [1] : vector<8x32xf32> to vector<8xf32>
    %23 = vector.shape_cast %22 : vector<8xf32> to vector<8x1xf32>
    %cst_16 = arith.constant 3.200000e+01 : f32
    %24 = vector.broadcast %cst_16 : f32 to vector<8x1xf32>
    %25 = arith.divf %23, %24 : vector<8x1xf32>
    %26 = vector.broadcast %18 : vector<8x1xf32> to vector<8x32xf32>
    %27 = arith.subf %3, %26 : vector<8x32xf32>
    %cst_17 = arith.constant 9.99999974E-6 : f32
    %28 = vector.broadcast %cst_17 : f32 to vector<8x1xf32>
    %29 = arith.addf %25, %28 : vector<8x1xf32>
    %30 = math.rsqrt %29 : vector<8x1xf32>
    %31 = vector.broadcast %30 : vector<8x1xf32> to vector<8x32xf32>
    %32 = arith.mulf %27, %31 : vector<8x32xf32>
    %33 = vector.broadcast %12 : vector<1x32xf32> to vector<8x32xf32>
    %34 = arith.mulf %32, %33 : vector<8x32xf32>
    %35 = vector.broadcast %14 : vector<1x32xf32> to vector<8x32xf32>
    %36 = arith.addf %34, %35 : vector<8x32xf32>
    %37 = arith.truncf %36 : vector<8x32xf32> to vector<8x32xbf16>
    %c0_18 = arith.constant 0 : index
    %c0_19 = arith.constant 0 : index
    %c0_20 = arith.constant 0 : index
    %38 = vector.load %arg6[%c0_18, %c0_19, %c0_20] : memref<1x32x32xbf16, #tpu.memory_space<vmem>>, vector<1x32x32xbf16>
    %39 = vector.shape_cast %38 : vector<1x32x32xbf16> to vector<32x32xbf16>
    %cst_21 = arith.constant dense<0.000000e+00> : vector<8x32xf32>
    %40 = tpu.matmul %37, %39, %cst_21 {dimension_numbers = #tpu.dot_dimension_numbers<[1], [0], [0], [1], [0, 0, 1, 1], [], []>} : vector<8x32xbf16>, vector<32x32xbf16>, vector<8x32xf32> -> vector<8x32xf32>
    %c0_22 = arith.constant 0 : index
    %c0_23 = arith.constant 0 : index
    %c0_24 = arith.constant 0 : index
    %41 = vector.load %arg7[%c0_22, %c0_23, %c0_24] : memref<1x1x32xf32, #tpu.memory_space<vmem>>, vector<1x1x32xf32>
    %42 = vector.shape_cast %41 : vector<1x1x32xf32> to vector<1x32xf32>
    %43 = vector.broadcast %42 : vector<1x32xf32> to vector<8x32xf32>
    %44 = arith.addf %40, %43 : vector<8x32xf32>
    %c0_25 = arith.constant 0 : index
    %c0_26 = arith.constant 0 : index
    %c0_27 = arith.constant 0 : index
    %45 = vector.load %arg8[%c0_25, %c0_26, %c0_27] : memref<1x32x32xbf16, #tpu.memory_space<vmem>>, vector<1x32x32xbf16>
    %46 = vector.shape_cast %45 : vector<1x32x32xbf16> to vector<32x32xbf16>
    %cst_28 = arith.constant dense<0.000000e+00> : vector<8x32xf32>
    %47 = tpu.matmul %37, %46, %cst_28 {dimension_numbers = #tpu.dot_dimension_numbers<[1], [0], [0], [1], [0, 0, 1, 1], [], []>} : vector<8x32xbf16>, vector<32x32xbf16>, vector<8x32xf32> -> vector<8x32xf32>
    %c0_29 = arith.constant 0 : index
    %c0_30 = arith.constant 0 : index
    %c0_31 = arith.constant 0 : index
    %48 = vector.load %arg9[%c0_29, %c0_30, %c0_31] : memref<1x1x32xf32, #tpu.memory_space<vmem>>, vector<1x1x32xf32>
    %49 = vector.shape_cast %48 : vector<1x1x32xf32> to vector<1x32xf32>
    %50 = vector.broadcast %49 : vector<1x32xf32> to vector<8x32xf32>
    %51 = arith.addf %47, %50 : vector<8x32xf32>
    %c0_32 = arith.constant 0 : index
    %c0_33 = arith.constant 0 : index
    %c0_34 = arith.constant 0 : index
    %52 = vector.load %arg10[%c0_32, %c0_33, %c0_34] : memref<1x32x32xbf16, #tpu.memory_space<vmem>>, vector<1x32x32xbf16>
    %53 = vector.shape_cast %52 : vector<1x32x32xbf16> to vector<32x32xbf16>
    %cst_35 = arith.constant dense<0.000000e+00> : vector<8x32xf32>
    %54 = tpu.matmul %37, %53, %cst_35 {dimension_numbers = #tpu.dot_dimension_numbers<[1], [0], [0], [1], [0, 0, 1, 1], [], []>} : vector<8x32xbf16>, vector<32x32xbf16>, vector<8x32xf32> -> vector<8x32xf32>
    %c0_36 = arith.constant 0 : index
    %c0_37 = arith.constant 0 : index
    %c0_38 = arith.constant 0 : index
    %55 = vector.load %arg11[%c0_36, %c0_37, %c0_38] : memref<1x1x32xf32, #tpu.memory_space<vmem>>, vector<1x1x32xf32>
    %56 = vector.shape_cast %55 : vector<1x1x32xf32> to vector<1x32xf32>
    %57 = vector.broadcast %56 : vector<1x32xf32> to vector<8x32xf32>
    %58 = arith.addf %54, %57 : vector<8x32xf32>
    %59 = vector.shape_cast %44 : vector<8x32xf32> to vector<8x4x8xf32>
    %60 = tpu.transpose %59, [1, 0, 2] : vector<8x4x8xf32> -> vector<4x8x8xf32>
    %61 = arith.truncf %60 : vector<4x8x8xf32> to vector<4x8x8xbf16>
    %62 = vector.shape_cast %51 : vector<8x32xf32> to vector<8x4x8xf32>
    %63 = tpu.transpose %62, [1, 0, 2] : vector<8x4x8xf32> -> vector<4x8x8xf32>
    %64 = arith.truncf %63 : vector<4x8x8xf32> to vector<4x8x8xbf16>
    %65 = vector.shape_cast %58 : vector<8x32xf32> to vector<8x4x8xf32>
    %66 = tpu.transpose %65, [1, 0, 2] : vector<8x4x8xf32> -> vector<4x8x8xf32>
    %67 = arith.truncf %66 : vector<4x8x8xf32> to vector<4x8x8xbf16>
    "tpu.trace_start"() <{level = 10 : i32, message = "hqd,hkd->hqk"}> : () -> ()
    %cst_39 = arith.constant dense<0.000000e+00> : vector<4x8x8xf32>
    %68 = tpu.matmul %61, %64, %cst_39 {dimension_numbers = #tpu.dot_dimension_numbers<[2], [2], [1], [1], [0, 0, 0, 1, 1, 1], [0], [0]>} : vector<4x8x8xbf16>, vector<4x8x8xbf16>, vector<4x8x8xf32> -> vector<4x8x8xf32>
    "tpu.trace_stop"() : () -> ()
    %cst_40 = arith.constant 0.353553385 : f32
    %69 = vector.broadcast %cst_40 : f32 to vector<4x8x8xf32>
    %70 = arith.mulf %68, %69 : vector<4x8x8xf32>
    %71 = vector.shape_cast %10 : vector<1x8xf32> to vector<1x1x8xf32>
    %72 = vector.broadcast %71 : vector<1x1x8xf32> to vector<4x8x8xf32>
    %73 = arith.addf %70, %72 : vector<4x8x8xf32>
    %cst_41 = arith.constant dense<0xFF800000> : vector<4x8xf32>
    %74 = vector.multi_reduction <maximumf>, %73, %cst_41 [2] : vector<4x8x8xf32> to vector<4x8xf32>
    %75 = vector.shape_cast %74 : vector<4x8xf32> to vector<4x8x1xf32>
    %76 = vector.broadcast %75 : vector<4x8x1xf32> to vector<4x8x8xf32>
    %77 = arith.subf %73, %76 : vector<4x8x8xf32>
    %78 = math.exp %77 : vector<4x8x8xf32>
    %cst_42 = arith.constant dense<0.000000e+00> : vector<4x8xf32>
    %79 = vector.multi_reduction <add>, %78, %cst_42 [2] : vector<4x8x8xf32> to vector<4x8xf32>
    %80 = vector.shape_cast %79 : vector<4x8xf32> to vector<4x8x1xf32>
    %81 = tpu.reciprocal %80 {approx = true} : vector<4x8x1xf32> -> vector<4x8x1xf32>
    %82 = vector.broadcast %81 : vector<4x8x1xf32> to vector<4x8x8xf32>
    %83 = arith.mulf %78, %82 : vector<4x8x8xf32>
    %84 = arith.truncf %83 : vector<4x8x8xf32> to vector<4x8x8xbf16>
    "tpu.trace_start"() <{level = 10 : i32, message = "hqk,hkd->hqd"}> : () -> ()
    %cst_43 = arith.constant dense<0.000000e+00> : vector<4x8x8xf32>
    %85 = tpu.matmul %84, %67, %cst_43 {dimension_numbers = #tpu.dot_dimension_numbers<[2], [1], [1], [2], [0, 0, 0, 1, 1, 2], [0], [0]>} : vector<4x8x8xbf16>, vector<4x8x8xbf16>, vector<4x8x8xf32> -> vector<4x8x8xf32>
    "tpu.trace_stop"() : () -> ()
    %86 = tpu.transpose %85, [1, 0, 2] : vector<4x8x8xf32> -> vector<8x4x8xf32>
    %87 = vector.shape_cast %86 : vector<8x4x8xf32> to vector<8x32xf32>
    %88 = arith.truncf %87 : vector<8x32xf32> to vector<8x32xbf16>
    %c0_44 = arith.constant 0 : index
    %c0_45 = arith.constant 0 : index
    %c0_46 = arith.constant 0 : index
    %89 = vector.load %arg12[%c0_44, %c0_45, %c0_46] : memref<1x32x32xbf16, #tpu.memory_space<vmem>>, vector<1x32x32xbf16>
    %90 = vector.shape_cast %89 : vector<1x32x32xbf16> to vector<32x32xbf16>
    %cst_47 = arith.constant dense<0.000000e+00> : vector<8x32xf32>
    %91 = tpu.matmul %88, %90, %cst_47 {dimension_numbers = #tpu.dot_dimension_numbers<[1], [0], [0], [1], [0, 0, 1, 1], [], []>} : vector<8x32xbf16>, vector<32x32xbf16>, vector<8x32xf32> -> vector<8x32xf32>
    %c0_48 = arith.constant 0 : index
    %c0_49 = arith.constant 0 : index
    %c0_50 = arith.constant 0 : index
    %92 = vector.load %arg13[%c0_48, %c0_49, %c0_50] : memref<1x1x32xf32, #tpu.memory_space<vmem>>, vector<1x1x32xf32>
    %93 = vector.shape_cast %92 : vector<1x1x32xf32> to vector<1x32xf32>
    %94 = vector.broadcast %93 : vector<1x32xf32> to vector<8x32xf32>
    %95 = arith.addf %91, %94 : vector<8x32xf32>
    %96 = arith.addf %3, %95 : vector<8x32xf32>
    %c0_51 = arith.constant 0 : index
    %c0_52 = arith.constant 0 : index
    %c0_53 = arith.constant 0 : index
    %97 = vector.load %arg14[%c0_51, %c0_52, %c0_53] : memref<1x1x32xf32, #tpu.memory_space<vmem>>, vector<1x1x32xf32>
    %98 = vector.shape_cast %97 : vector<1x1x32xf32> to vector<1x32xf32>
    %c0_54 = arith.constant 0 : index
    %c0_55 = arith.constant 0 : index
    %c0_56 = arith.constant 0 : index
    %99 = vector.load %arg15[%c0_54, %c0_55, %c0_56] : memref<1x1x32xf32, #tpu.memory_space<vmem>>, vector<1x1x32xf32>
    %100 = vector.shape_cast %99 : vector<1x1x32xf32> to vector<1x32xf32>
    %cst_57 = arith.constant dense<0.000000e+00> : vector<8xf32>
    %101 = vector.multi_reduction <add>, %96, %cst_57 [1] : vector<8x32xf32> to vector<8xf32>
    %102 = vector.shape_cast %101 : vector<8xf32> to vector<8x1xf32>
    %cst_58 = arith.constant 3.200000e+01 : f32
    %103 = vector.broadcast %cst_58 : f32 to vector<8x1xf32>
    %104 = arith.divf %102, %103 : vector<8x1xf32>
    %105 = vector.broadcast %104 : vector<8x1xf32> to vector<8x32xf32>
    %106 = arith.subf %96, %105 : vector<8x32xf32>
    %107 = arith.mulf %106, %106 : vector<8x32xf32>
    %cst_59 = arith.constant dense<0.000000e+00> : vector<8xf32>
    %108 = vector.multi_reduction <add>, %107, %cst_59 [1] : vector<8x32xf32> to vector<8xf32>
    %109 = vector.shape_cast %108 : vector<8xf32> to vector<8x1xf32>
    %cst_60 = arith.constant 3.200000e+01 : f32
    %110 = vector.broadcast %cst_60 : f32 to vector<8x1xf32>
    %111 = arith.divf %109, %110 : vector<8x1xf32>
    %112 = vector.broadcast %104 : vector<8x1xf32> to vector<8x32xf32>
    %113 = arith.subf %96, %112 : vector<8x32xf32>
    %cst_61 = arith.constant 9.99999974E-6 : f32
    %114 = vector.broadcast %cst_61 : f32 to vector<8x1xf32>
    %115 = arith.addf %111, %114 : vector<8x1xf32>
    %116 = math.rsqrt %115 : vector<8x1xf32>
    %117 = vector.broadcast %116 : vector<8x1xf32> to vector<8x32xf32>
    %118 = arith.mulf %113, %117 : vector<8x32xf32>
    %119 = vector.broadcast %98 : vector<1x32xf32> to vector<8x32xf32>
    %120 = arith.mulf %118, %119 : vector<8x32xf32>
    %121 = vector.broadcast %100 : vector<1x32xf32> to vector<8x32xf32>
    %122 = arith.addf %120, %121 : vector<8x32xf32>
    %123 = arith.truncf %122 : vector<8x32xf32> to vector<8x32xbf16>
    %c0_62 = arith.constant 0 : index
    %c0_63 = arith.constant 0 : index
    %c0_64 = arith.constant 0 : index
    %124 = vector.load %arg16[%c0_62, %c0_63, %c0_64] : memref<1x32x64xbf16, #tpu.memory_space<vmem>>, vector<1x32x64xbf16>
    %125 = vector.shape_cast %124 : vector<1x32x64xbf16> to vector<32x64xbf16>
    %cst_65 = arith.constant dense<0.000000e+00> : vector<8x64xf32>
    %126 = tpu.matmul %123, %125, %cst_65 {dimension_numbers = #tpu.dot_dimension_numbers<[1], [0], [0], [1], [0, 0, 1, 1], [], []>} : vector<8x32xbf16>, vector<32x64xbf16>, vector<8x64xf32> -> vector<8x64xf32>
    %c0_66 = arith.constant 0 : index
    %c0_67 = arith.constant 0 : index
    %c0_68 = arith.constant 0 : index
    %127 = vector.load %arg17[%c0_66, %c0_67, %c0_68] : memref<1x1x64xf32, #tpu.memory_space<vmem>>, vector<1x1x64xf32>
    %128 = vector.shape_cast %127 : vector<1x1x64xf32> to vector<1x64xf32>
    %129 = vector.broadcast %128 : vector<1x64xf32> to vector<8x64xf32>
    %130 = arith.addf %126, %129 : vector<8x64xf32>
    %cst_69 = arith.constant 0.000000e+00 : f32
    %131 = vector.broadcast %cst_69 : f32 to vector<8x64xf32>
    %132 = arith.maximumf %130, %131 : vector<8x64xf32>
    %133 = arith.truncf %132 : vector<8x64xf32> to vector<8x64xbf16>
    %c0_70 = arith.constant 0 : index
    %c0_71 = arith.constant 0 : index
    %c0_72 = arith.constant 0 : index
    %134 = vector.load %arg18[%c0_70, %c0_71, %c0_72] : memref<1x64x32xbf16, #tpu.memory_space<vmem>>, vector<1x64x32xbf16>
    %135 = vector.shape_cast %134 : vector<1x64x32xbf16> to vector<64x32xbf16>
    %cst_73 = arith.constant dense<0.000000e+00> : vector<8x32xf32>
    %136 = tpu.matmul %133, %135, %cst_73 {dimension_numbers = #tpu.dot_dimension_numbers<[1], [0], [0], [1], [0, 0, 1, 1], [], []>} : vector<8x64xbf16>, vector<64x32xbf16>, vector<8x32xf32> -> vector<8x32xf32>
    %c0_74 = arith.constant 0 : index
    %c0_75 = arith.constant 0 : index
    %c0_76 = arith.constant 0 : index
    %137 = vector.load %arg19[%c0_74, %c0_75, %c0_76] : memref<1x1x32xf32, #tpu.memory_space<vmem>>, vector<1x1x32xf32>
    %138 = vector.shape_cast %137 : vector<1x1x32xf32> to vector<1x32xf32>
    %139 = vector.broadcast %138 : vector<1x32xf32> to vector<8x32xf32>
    %140 = arith.addf %136, %139 : vector<8x32xf32>
    %141 = arith.addf %96, %140 : vector<8x32xf32>
    %c0_77 = arith.constant 0 : index
    %c0_78 = arith.constant 0 : index
    %142 = vector.load %arg23[%c0_77, %c0_78] : memref<8x32xf32, #tpu.memory_space<vmem>>, vector<8x32xf32>
    tpu.vector_store %arg23[%c0_77, %c0_78], %141 {strides = array<i32>} : memref<8x32xf32, #tpu.memory_space<vmem>>, vector<8x32xf32>,
    %c1_i32 = arith.constant 1 : i32
    %143 = arith.cmpi eq, %arg1, %c1_i32 : i32
    %144 = arith.extui %143 : i1 to i32
    %c0_i32_79 = arith.constant 0 : i32
    %145 = arith.cmpi ne, %144, %c0_i32_79 : i32
    scf.if %145 {
      %c0_80 = arith.constant 0 : index
      %c0_81 = arith.constant 0 : index
      %146 = vector.load %arg20[%c0_80, %c0_81] : memref<1x32xf32, #tpu.memory_space<vmem>>, vector<1x32xf32>
      %c0_82 = arith.constant 0 : index
      %c0_83 = arith.constant 0 : index
      %147 = vector.load %arg21[%c0_82, %c0_83] : memref<1x32xf32, #tpu.memory_space<vmem>>, vector<1x32xf32>
      %cst_84 = arith.constant dense<0.000000e+00> : vector<8xf32>
      %148 = vector.multi_reduction <add>, %141, %cst_84 [1] : vector<8x32xf32> to vector<8xf32>
      %149 = vector.shape_cast %148 : vector<8xf32> to vector<8x1xf32>
      %cst_85 = arith.constant 3.200000e+01 : f32
      %150 = vector.broadcast %cst_85 : f32 to vector<8x1xf32>
      %151 = arith.divf %149, %150 : vector<8x1xf32>
      %152 = vector.broadcast %151 : vector<8x1xf32> to vector<8x32xf32>
      %153 = arith.subf %141, %152 : vector<8x32xf32>
      %154 = arith.mulf %153, %153 : vector<8x32xf32>
      %cst_86 = arith.constant dense<0.000000e+00> : vector<8xf32>
      %155 = vector.multi_reduction <add>, %154, %cst_86 [1] : vector<8x32xf32> to vector<8xf32>
      %156 = vector.shape_cast %155 : vector<8xf32> to vector<8x1xf32>
      %cst_87 = arith.constant 3.200000e+01 : f32
      %157 = vector.broadcast %cst_87 : f32 to vector<8x1xf32>
      %158 = arith.divf %156, %157 : vector<8x1xf32>
      %159 = vector.broadcast %151 : vector<8x1xf32> to vector<8x32xf32>
      %160 = arith.subf %141, %159 : vector<8x32xf32>
      %cst_88 = arith.constant 9.99999974E-6 : f32
      %161 = vector.broadcast %cst_88 : f32 to vector<8x1xf32>
      %162 = arith.addf %158, %161 : vector<8x1xf32>
      %163 = math.rsqrt %162 : vector<8x1xf32>
      %164 = vector.broadcast %163 : vector<8x1xf32> to vector<8x32xf32>
      %165 = arith.mulf %160, %164 : vector<8x32xf32>
      %166 = vector.broadcast %146 : vector<1x32xf32> to vector<8x32xf32>
      %167 = arith.mulf %165, %166 : vector<8x32xf32>
      %168 = vector.broadcast %147 : vector<1x32xf32> to vector<8x32xf32>
      %169 = arith.addf %167, %168 : vector<8x32xf32>
      %c0_89 = arith.constant 0 : index
      %c0_90 = arith.constant 0 : index
      %c0_91 = arith.constant 0 : index
      %170 = vector.load %arg22[%c0_89, %c0_90, %c0_91] : memref<1x8x32xf32, #tpu.memory_space<vmem>>, vector<1x8x32xf32>
      %171 = vector.shape_cast %170 : vector<1x8x32xf32> to vector<8x32xf32>
      %172 = vector.shape_cast %169 : vector<8x32xf32> to vector<1x8x32xf32>
      tpu.vector_store %arg22[%c0_89, %c0_90, %c0_91], %172 {strides = array<i32>} : memref<1x8x32xf32, #tpu.memory_space<vmem>>, vector<1x8x32xf32>,
    } else {
    }
    return
  }
  func.func @transform_0(%arg0: i32, %arg1: i32) -> (i32, i32, i32) {
    %c0_i32 = arith.constant 0 : i32
    %c0_i32_0 = arith.constant 0 : i32
    %c0_i32_1 = arith.constant 0 : i32
    return %arg0, %c0_i32, %c0_i32_0 : i32, i32, i32
  }
  func.func @transform_1(%arg0: i32, %arg1: i32) -> (i32, i32, i32) {
    %c0_i32 = arith.constant 0 : i32
    %c0_i32_0 = arith.constant 0 : i32
    %c0_i32_1 = arith.constant 0 : i32
    return %arg0, %c0_i32, %c0_i32_0 : i32, i32, i32
  }
  func.func @transform_2(%arg0: i32, %arg1: i32) -> (i32, i32, i32) {
    %c0_i32 = arith.constant 0 : i32
    %c0_i32_0 = arith.constant 0 : i32
    %c0_i32_1 = arith.constant 0 : i32
    return %arg1, %c0_i32, %c0_i32_0 : i32, i32, i32
  }
  func.func @transform_3(%arg0: i32, %arg1: i32) -> (i32, i32, i32) {
    %c0_i32 = arith.constant 0 : i32
    %c0_i32_0 = arith.constant 0 : i32
    %c0_i32_1 = arith.constant 0 : i32
    return %arg1, %c0_i32, %c0_i32_0 : i32, i32, i32
  }
  func.func @transform_4(%arg0: i32, %arg1: i32) -> (i32, i32, i32) {
    %c0_i32 = arith.constant 0 : i32
    %c0_i32_0 = arith.constant 0 : i32
    %c0_i32_1 = arith.constant 0 : i32
    return %arg1, %c0_i32, %c0_i32_0 : i32, i32, i32
  }
  func.func @transform_5(%arg0: i32, %arg1: i32) -> (i32, i32, i32) {
    %c0_i32 = arith.constant 0 : i32
    %c0_i32_0 = arith.constant 0 : i32
    %c0_i32_1 = arith.constant 0 : i32
    return %arg1, %c0_i32, %c0_i32_0 : i32, i32, i32
  }
  func.func @transform_6(%arg0: i32, %arg1: i32) -> (i32, i32, i32) {
    %c0_i32 = arith.constant 0 : i32
    %c0_i32_0 = arith.constant 0 : i32
    %c0_i32_1 = arith.constant 0 : i32
    return %arg1, %c0_i32, %c0_i32_0 : i32, i32, i32
  }
  func.func @transform_7(%arg0: i32, %arg1: i32) -> (i32, i32, i32) {
    %c0_i32 = arith.constant 0 : i32
    %c0_i32_0 = arith.constant 0 : i32
    %c0_i32_1 = arith.constant 0 : i32
    return %arg1, %c0_i32, %c0_i32_0 : i32, i32, i32
  }
  func.func @transform_8(%arg0: i32, %arg1: i32) -> (i32, i32, i32) {
    %c0_i32 = arith.constant 0 : i32
    %c0_i32_0 = arith.constant 0 : i32
    %c0_i32_1 = arith.constant 0 : i32
    return %arg1, %c0_i32, %c0_i32_0 : i32, i32, i32
  }
  func.func @transform_9(%arg0: i32, %arg1: i32) -> (i32, i32, i32) {
    %c0_i32 = arith.constant 0 : i32
    %c0_i32_0 = arith.constant 0 : i32
    %c0_i32_1 = arith.constant 0 : i32
    return %arg1, %c0_i32, %c0_i32_0 : i32, i32, i32
  }
  func.func @transform_10(%arg0: i32, %arg1: i32) -> (i32, i32, i32) {
    %c0_i32 = arith.constant 0 : i32
    %c0_i32_0 = arith.constant 0 : i32
    %c0_i32_1 = arith.constant 0 : i32
    return %arg1, %c0_i32, %c0_i32_0 : i32, i32, i32
  }
  func.func @transform_11(%arg0: i32, %arg1: i32) -> (i32, i32, i32) {
    %c0_i32 = arith.constant 0 : i32
    %c0_i32_0 = arith.constant 0 : i32
    %c0_i32_1 = arith.constant 0 : i32
    return %arg1, %c0_i32, %c0_i32_0 : i32, i32, i32
  }
  func.func @transform_12(%arg0: i32, %arg1: i32) -> (i32, i32, i32) {
    %c0_i32 = arith.constant 0 : i32
    %c0_i32_0 = arith.constant 0 : i32
    %c0_i32_1 = arith.constant 0 : i32
    return %arg1, %c0_i32, %c0_i32_0 : i32, i32, i32
  }
  func.func @transform_13(%arg0: i32, %arg1: i32) -> (i32, i32, i32) {
    %c0_i32 = arith.constant 0 : i32
    %c0_i32_0 = arith.constant 0 : i32
    %c0_i32_1 = arith.constant 0 : i32
    return %arg1, %c0_i32, %c0_i32_0 : i32, i32, i32
  }
  func.func @transform_14(%arg0: i32, %arg1: i32) -> (i32, i32, i32) {
    %c0_i32 = arith.constant 0 : i32
    %c0_i32_0 = arith.constant 0 : i32
    %c0_i32_1 = arith.constant 0 : i32
    return %arg1, %c0_i32, %c0_i32_0 : i32, i32, i32
  }
  func.func @transform_15(%arg0: i32, %arg1: i32) -> (i32, i32, i32) {
    %c0_i32 = arith.constant 0 : i32
    %c0_i32_0 = arith.constant 0 : i32
    %c0_i32_1 = arith.constant 0 : i32
    return %arg1, %c0_i32, %c0_i32_0 : i32, i32, i32
  }
  func.func @transform_16(%arg0: i32, %arg1: i32) -> (i32, i32, i32) {
    %c0_i32 = arith.constant 0 : i32
    %c0_i32_0 = arith.constant 0 : i32
    %c0_i32_1 = arith.constant 0 : i32
    return %arg1, %c0_i32, %c0_i32_0 : i32, i32, i32
  }
  func.func @transform_17(%arg0: i32, %arg1: i32) -> (i32, i32, i32) {
    %c0_i32 = arith.constant 0 : i32
    %c0_i32_0 = arith.constant 0 : i32
    %c0_i32_1 = arith.constant 0 : i32
    return %arg1, %c0_i32, %c0_i32_0 : i32, i32, i32
  }
  func.func @transform_18(%arg0: i32, %arg1: i32) -> (i32, i32) {
    %c0_i32 = arith.constant 0 : i32
    %c0_i32_0 = arith.constant 0 : i32
    %c0_i32_1 = arith.constant 0 : i32
    return %c0_i32, %c0_i32_0 : i32, i32
  }
  func.func @transform_19(%arg0: i32, %arg1: i32) -> (i32, i32) {
    %c0_i32 = arith.constant 0 : i32
    %c0_i32_0 = arith.constant 0 : i32
    %c0_i32_1 = arith.constant 0 : i32
    return %c0_i32, %c0_i32_0 : i32, i32
  }
  func.func @transform_20(%arg0: i32, %arg1: i32) -> (i32, i32, i32) {
    %c0_i32 = arith.constant 0 : i32
    %c0_i32_0 = arith.constant 0 : i32
    %c0_i32_1 = arith.constant 0 : i32
    return %arg0, %c0_i32, %c0_i32_0 : i32, i32, i32
  }
}

</mosaic_0001>

<llo_original>
// kernel: tpu_custom_call.1
$region0: #{tpu_custom_call.1}
  #allocation0 [shape = 'u32[]', space=smem, size = 0x4, offset = 0x4, fixed_abs, tag = 'smem constant byte address 0x4 - core index']
  #allocation1 [shape = 'u32[144,128]{1,0:T(1,128)}', space=vmem, size = 0x12000, scoped, tag = 'internal scratch']
  #allocation2 [shape = 'f32[8,32]{1,0:T(8,128)}', space=vmem, size = 0x1000, scoped, tag = 'scratch operand']
  %s0 = inlined_call_operand.hbm [shape: f32[2,8,32], index: 0, kind: input, shape index: {}]
  %s1 = inlined_call_operand.vmem [shape: f32[2,1,8], index: 1, kind: input, shape index: {}]
  %s2 = inlined_call_operand.vmem [shape: f32[2,1,32], index: 2, kind: input, shape index: {}]
  %s3 = inlined_call_operand.vmem [shape: f32[2,1,32], index: 3, kind: input, shape index: {}]
  %s4 = inlined_call_operand.vmem [shape: bf16[2,32,32], index: 4, kind: input, shape index: {}]
  %s5 = inlined_call_operand.vmem [shape: f32[2,1,32], index: 5, kind: input, shape index: {}]
  %s6 = inlined_call_operand.vmem [shape: bf16[2,32,32], index: 6, kind: input, shape index: {}]
  %s7 = inlined_call_operand.vmem [shape: f32[2,1,32], index: 7, kind: input, shape index: {}]
  %s8 = inlined_call_operand.vmem [shape: bf16[2,32,32], index: 8, kind: input, shape index: {}]
  %s9 = inlined_call_operand.vmem [shape: f32[2,1,32], index: 9, kind: input, shape index: {}]
  %s10 = inlined_call_operand.hbm [shape: bf16[2,32,32], index: 10, kind: input, shape index: {}]
  %s11 = inlined_call_operand.vmem [shape: f32[2,1,32], index: 11, kind: input, shape index: {}]
  %s12 = inlined_call_operand.vmem [shape: f32[2,1,32], index: 12, kind: input, shape index: {}]
  %s13 = inlined_call_operand.vmem [shape: f32[2,1,32], index: 13, kind: input, shape index: {}]
  %s14 = inlined_call_operand.hbm [shape: bf16[2,32,64], index: 14, kind: input, shape index: {}]
  %s15 = inlined_call_operand.vmem [shape: f32[2,1,64], index: 15, kind: input, shape index: {}]
  %s16 = inlined_call_operand.vmem [shape: bf16[2,64,32], index: 16, kind: input, shape index: {}]
  %s17 = inlined_call_operand.vmem [shape: f32[2,1,32], index: 17, kind: input, shape index: {}]
  %s18 = inlined_call_operand.vmem [shape: f32[1,32], index: 18, kind: input, shape index: {}]
  %s19 = inlined_call_operand.vmem [shape: f32[1,32], index: 19, kind: input, shape index: {}]
  %s20 = inlined_call_operand.hbm [shape: f32[2,8,32], index: 20, kind: output, shape index: {}]
  %s21 = sld [smem:[#allocation0]]
  $region133: #{tpu_custom_call.1} parent=0
    _
  %s23 = ssub.s32 1, %s21
  %s24 = scalar_select 0, %s23, %s21
  $region1: #{tpu_custom_call.1} parent=0
    #allocation3 [shape = 'u8[8192]{0}', space=vmem, size = 0x2000, scoped, tag = 'input window, operand 0']
    #allocation4 [shape = 's32[2]{0}', space=sflag, size = 0x8, scoped, tag = 'scoped memory for tpu_custom_call.1']
    #allocation5 [shape = 's32[2]{0}', space=sflag, size = 0x8, scoped, tag = 'scoped memory for tpu_custom_call.1']
    #allocation6 [shape = 'u8[16384]{0}', space=vmem, size = 0x4000, scoped, tag = 'input window, operand 10']
    #allocation7 [shape = 's32[2]{0}', space=sflag, size = 0x8, scoped, tag = 'scoped memory for tpu_custom_call.1']
    #allocation8 [shape = 'u8[16384]{0}', space=vmem, size = 0x4000, scoped, tag = 'input window, operand 14']
    #allocation9 [shape = 'u8[8192]{0}', space=vmem, size = 0x2000, scoped, tag = 'output window, operand 0']
    %25 = vsyncpa [#allocation4], 0
    %s26 = scalar_lea.sflag [#allocation4], 1
    %27 = vsyncpa %s26, 0
    %28 = vsyncpa [#allocation7], 0
    %s29 = scalar_lea.sflag [#allocation7], 1
    %30 = vsyncpa %s29, 0
    %31 = vsyncpa [#allocation5], 0
    %s32 = scalar_lea.sflag [#allocation5], 1
    %33 = vsyncpa %s32, 0
    loop: start=0, step=1, limit=6
    $region2: #{tpu_custom_call.1} parent=1 // loop_pre_header
      _
    $region3: #{tpu_custom_call.1} parent=1 // loop_header
      %s35 = sphi 0, %s39
      %p36 = scmp.ge.s32.totalorder %s35, 6
      %s42 = sphi 0, %s54
      %s43 = sphi 0, %s50
      %s44 = sphi 0, %s42
      %s45 = sphi 0, %s43
      %s46 = sphi 0, %s44
      %s47 = sphi 0, %s45
      %s57 = sphi 0, %s59
      %s60 = sphi 0, %s57
      %s61 = sphi 0, %s60
      %s77 = sphi 0, %s61
      %s83 = sphi 0, %s85
      %s86 = sphi 0, %s83
      %s87 = sphi 0, %s86
      %s103 = sphi 0, %s87
      %s109 = sphi 0, %s111
      %s112 = sphi 0, %s109
      %s113 = sphi 0, %s112
      %s129 = sphi 0, %s113
      %s135 = sphi 0, %s137
      %s138 = sphi 0, %s135
      %s139 = sphi 0, %s138
      %s155 = sphi 0, %s139
      %s161 = sphi 0, %s163
      %s164 = sphi 0, %s161
      %s165 = sphi 0, %s164
      %s181 = sphi 0, %s165
      %s187 = sphi 0, %s189
      %s190 = sphi 0, %s187
      %s191 = sphi 0, %s190
      %s207 = sphi 0, %s191
      %s213 = sphi 0, %s215
      %s216 = sphi 0, %s213
      %s217 = sphi 0, %s216
      %s233 = sphi 0, %s217
      %s239 = sphi 0, %s241
      %s242 = sphi 0, %s239
      %s243 = sphi 0, %s242
      %s259 = sphi 0, %s243
      %s265 = sphi 0, %s267
      %s268 = sphi 0, %s265
      %s269 = sphi 0, %s268
      %s285 = sphi 0, %s269
      %s291 = sphi 0, %s293
      %s294 = sphi 0, %s291
      %s295 = sphi 0, %s294
      %s311 = sphi 0, %s295
      %s317 = sphi 0, %s319
      %s320 = sphi 0, %s317
      %s321 = sphi 0, %s320
      %s337 = sphi 0, %s321
      %s343 = sphi 0, %s345
      %s346 = sphi 0, %s343
      %s347 = sphi 0, %s346
      %s363 = sphi 0, %s347
      %s369 = sphi 0, %s371
      %s372 = sphi 0, %s369
      %s373 = sphi 0, %s372
      %s389 = sphi 0, %s373
      %s395 = sphi 0, %s397
      %s398 = sphi 0, %s395
      %s399 = sphi 0, %s398
      %s415 = sphi 0, %s399
      %s421 = sphi 0, %s423
      %s424 = sphi 0, %s421
      %s425 = sphi 0, %s424
      %s441 = sphi 0, %s425
      %s447 = sphi 0, %s449
      %s450 = sphi 0, %s447
      %s451 = sphi 0, %s450
      %s467 = sphi 0, %s451
      %s473 = sphi 0, %s475
      %s476 = sphi 0, %s473
      %s477 = sphi 0, %s476
      %s493 = sphi 0, %s477
      %s499 = sphi 0, %s501
      %s502 = sphi 0, %s499
      %s503 = sphi 0, %s502
      %s519 = sphi 0, %s503
      %s523 = sphi 0, %s523
      %s525 = sphi 0, %s523
      %s526 = sphi 0, %s525
      %s540 = sphi 0, %s526
      %s544 = sphi 0, %s544
      %s546 = sphi 0, %s544
      %s547 = sphi 0, %s546
      %s561 = sphi 0, %s547
      %s567 = sphi 0, %s569
      %s570 = sphi 0, %s567
      %s571 = sphi 0, %s570
      %s587 = sphi 0, %s571
    $region4: #{tpu_custom_call.1} parent=1 // loop_header_branch
      %38 = sbr.rel (%p36) target = $region8
    $region5: #{tpu_custom_call.1} parent=1 // loop_body
      %s40 = ssub.s32 %s35, 1
      %s41 = ssub.s32 %s35, 2
      %s48 = sadd.s32 1, %s43
      %p49 = scmp.ge.s32.totalorder %s48, 2
      %s50 = scalar_select %p49, 0, %s48
      %s51 = sadd.s32 1, %s42
      %s52 = scalar_select %p49, %s51, %s42
      %p53 = scmp.ge.s32.totalorder %s52, 2
      %s54 = scalar_select %p53, 0, %s52
      %s55 = ssub.s32 %s42, %s54
      %p56 = scmp.eq.s32.totalorder %s55, 0
      %s58 = sadd.s32 %s57, 1
      %s59 = scalar_select %p56, %s57, %s58
      %p62 = pneg %p56
      %p63 = scmp.eq.s32.totalorder %s35, 3
      %p64 = por %p62, %p63
      %p65 = scmp.ne.s32.totalorder %s57, %s60
      %p66 = scmp.eq.s32.totalorder %s35, 0
      %p67 = por %p65, %p66
      %p68 = scmp.ne.s32.totalorder %s57, %s60
      %p69 = scmp.eq.s32.totalorder %s40, 3
      %p70 = por %p68, %p69
      %p71 = scmp.ne.s32.totalorder %s60, %s61
      %p72 = scmp.eq.s32.totalorder %s40, 0
      %p73 = por %p71, %p72
      %p74 = scmp.ne.s32.totalorder %s60, %s61
      %p75 = scmp.eq.s32.totalorder %s41, 3
      %p76 = por %p74, %p75
      %p78 = scmp.ne.s32.totalorder %s61, %s77
      %p79 = scmp.eq.s32.totalorder %s41, 0
      %p80 = por %p78, %p79
      %s81 = ssub.s32 %s42, %s54
      %p82 = scmp.eq.s32.totalorder %s81, 0
      %s84 = sadd.s32 %s83, 1
      %s85 = scalar_select %p82, %s83, %s84
      %p88 = pneg %p82
      %p89 = scmp.eq.s32.totalorder %s35, 3
      %p90 = por %p88, %p89
      %p91 = scmp.ne.s32.totalorder %s83, %s86
      %p92 = scmp.eq.s32.totalorder %s35, 0
      %p93 = por %p91, %p92
      %p94 = scmp.ne.s32.totalorder %s83, %s86
      %p95 = scmp.eq.s32.totalorder %s40, 3
      %p96 = por %p94, %p95
      %p97 = scmp.ne.s32.totalorder %s86, %s87
      %p98 = scmp.eq.s32.totalorder %s40, 0
      %p99 = por %p97, %p98
      %p100 = scmp.ne.s32.totalorder %s86, %s87
      %p101 = scmp.eq.s32.totalorder %s41, 3
      %p102 = por %p100, %p101
      %p104 = scmp.ne.s32.totalorder %s87, %s103
      %p105 = scmp.eq.s32.totalorder %s41, 0
      %p106 = por %p104, %p105
      %s107 = ssub.s32 %s43, %s50
      %p108 = scmp.eq.s32.totalorder %s107, 0
      %s110 = sadd.s32 %s109, 1
      %s111 = scalar_select %p108, %s109, %s110
      %p114 = pneg %p108
      %p115 = scmp.eq.s32.totalorder %s35, 3
      %p116 = por %p114, %p115
      %p117 = scmp.ne.s32.totalorder %s109, %s112
      %p118 = scmp.eq.s32.totalorder %s35, 0
      %p119 = por %p117, %p118
      %p120 = scmp.ne.s32.totalorder %s109, %s112
      %p121 = scmp.eq.s32.totalorder %s40, 3
      %p122 = por %p120, %p121
      %p123 = scmp.ne.s32.totalorder %s112, %s113
      %p124 = scmp.eq.s32.totalorder %s40, 0
      %p125 = por %p123, %p124
      %p126 = scmp.ne.s32.totalorder %s112, %s113
      %p127 = scmp.eq.s32.totalorder %s41, 3
      %p128 = por %p126, %p127
      %p130 = scmp.ne.s32.totalorder %s113, %s129
      %p131 = scmp.eq.s32.totalorder %s41, 0
      %p132 = por %p130, %p131
      %s133 = ssub.s32 %s43, %s50
      %p134 = scmp.eq.s32.totalorder %s133, 0
      %s136 = sadd.s32 %s135, 1
      %s137 = scalar_select %p134, %s135, %s136
      %p140 = pneg %p134
      %p141 = scmp.eq.s32.totalorder %s35, 3
      %p142 = por %p140, %p141
      %p143 = scmp.ne.s32.totalorder %s135, %s138
      %p144 = scmp.eq.s32.totalorder %s35, 0
      %p145 = por %p143, %p144
      %p146 = scmp.ne.s32.totalorder %s135, %s138
      %p147 = scmp.eq.s32.totalorder %s40, 3
      %p148 = por %p146, %p147
      %p149 = scmp.ne.s32.totalorder %s138, %s139
      %p150 = scmp.eq.s32.totalorder %s40, 0
      %p151 = por %p149, %p150
      %p152 = scmp.ne.s32.totalorder %s138, %s139
      %p153 = scmp.eq.s32.totalorder %s41, 3
      %p154 = por %p152, %p153
      %p156 = scmp.ne.s32.totalorder %s139, %s155
      %p157 = scmp.eq.s32.totalorder %s41, 0
      %p158 = por %p156, %p157
      %s159 = ssub.s32 %s43, %s50
      %p160 = scmp.eq.s32.totalorder %s159, 0
      %s162 = sadd.s32 %s161, 1
      %s163 = scalar_select %p160, %s161, %s162
      %p166 = pneg %p160
      %p167 = scmp.eq.s32.totalorder %s35, 3
      %p168 = por %p166, %p167
      %p169 = scmp.ne.s32.totalorder %s161, %s164
      %p170 = scmp.eq.s32.totalorder %s35, 0
      %p171 = por %p169, %p170
      %p172 = scmp.ne.s32.totalorder %s161, %s164
      %p173 = scmp.eq.s32.totalorder %s40, 3
      %p174 = por %p172, %p173
      %p175 = scmp.ne.s32.totalorder %s164, %s165
      %p176 = scmp.eq.s32.totalorder %s40, 0
      %p177 = por %p175, %p176
      %p178 = scmp.ne.s32.totalorder %s164, %s165
      %p179 = scmp.eq.s32.totalorder %s41, 3
      %p180 = por %p178, %p179
      %p182 = scmp.ne.s32.totalorder %s165, %s181
      %p183 = scmp.eq.s32.totalorder %s41, 0
      %p184 = por %p182, %p183
      %s185 = ssub.s32 %s43, %s50
      %p186 = scmp.eq.s32.totalorder %s185, 0
      %s188 = sadd.s32 %s187, 1
      %s189 = scalar_select %p186, %s187, %s188
      %p192 = pneg %p186
      %p193 = scmp.eq.s32.totalorder %s35, 3
      %p194 = por %p192, %p193
      %p195 = scmp.ne.s32.totalorder %s187, %s190
      %p196 = scmp.eq.s32.totalorder %s35, 0
      %p197 = por %p195, %p196
      %p198 = scmp.ne.s32.totalorder %s187, %s190
      %p199 = scmp.eq.s32.totalorder %s40, 3
      %p200 = por %p198, %p199
      %p201 = scmp.ne.s32.totalorder %s190, %s191
      %p202 = scmp.eq.s32.totalorder %s40, 0
      %p203 = por %p201, %p202
      %p204 = scmp.ne.s32.totalorder %s190, %s191
      %p205 = scmp.eq.s32.totalorder %s41, 3
      %p206 = por %p204, %p205
      %p208 = scmp.ne.s32.totalorder %s191, %s207
      %p209 = scmp.eq.s32.totalorder %s41, 0
      %p210 = por %p208, %p209
      %s211 = ssub.s32 %s43, %s50
      %p212 = scmp.eq.s32.totalorder %s211, 0
      %s214 = sadd.s32 %s213, 1
      %s215 = scalar_select %p212, %s213, %s214
      %p218 = pneg %p212
      %p219 = scmp.eq.s32.totalorder %s35, 3
      %p220 = por %p218, %p219
      %p221 = scmp.ne.s32.totalorder %s213, %s216
      %p222 = scmp.eq.s32.totalorder %s35, 0
      %p223 = por %p221, %p222
      %p224 = scmp.ne.s32.totalorder %s213, %s216
      %p225 = scmp.eq.s32.totalorder %s40, 3
      %p226 = por %p224, %p225
      %p227 = scmp.ne.s32.totalorder %s216, %s217
      %p228 = scmp.eq.s32.totalorder %s40, 0
      %p229 = por %p227, %p228
      %p230 = scmp.ne.s32.totalorder %s216, %s217
      %p231 = scmp.eq.s32.totalorder %s41, 3
      %p232 = por %p230, %p231
      %p234 = scmp.ne.s32.totalorder %s217, %s233
      %p235 = scmp.eq.s32.totalorder %s41, 0
      %p236 = por %p234, %p235
      %s237 = ssub.s32 %s43, %s50
      %p238 = scmp.eq.s32.totalorder %s237, 0
      %s240 = sadd.s32 %s239, 1
      %s241 = scalar_select %p238, %s239, %s240
      %p244 = pneg %p238
      %p245 = scmp.eq.s32.totalorder %s35, 3
      %p246 = por %p244, %p245
      %p247 = scmp.ne.s32.totalorder %s239, %s242
      %p248 = scmp.eq.s32.totalorder %s35, 0
      %p249 = por %p247, %p248
      %p250 = scmp.ne.s32.totalorder %s239, %s242
      %p251 = scmp.eq.s32.totalorder %s40, 3
      %p252 = por %p250, %p251
      %p253 = scmp.ne.s32.totalorder %s242, %s243
      %p254 = scmp.eq.s32.totalorder %s40, 0
      %p255 = por %p253, %p254
      %p256 = scmp.ne.s32.totalorder %s242, %s243
      %p257 = scmp.eq.s32.totalorder %s41, 3
      %p258 = por %p256, %p257
      %p260 = scmp.ne.s32.totalorder %s243, %s259
      %p261 = scmp.eq.s32.totalorder %s41, 0
      %p262 = por %p260, %p261
      %s263 = ssub.s32 %s43, %s50
      %p264 = scmp.eq.s32.totalorder %s263, 0
      %s266 = sadd.s32 %s265, 1
      %s267 = scalar_select %p264, %s265, %s266
      %p270 = pneg %p264
      %p271 = scmp.eq.s32.totalorder %s35, 3
      %p272 = por %p270, %p271
      %p273 = scmp.ne.s32.totalorder %s265, %s268
      %p274 = scmp.eq.s32.totalorder %s35, 0
      %p275 = por %p273, %p274
      %p276 = scmp.ne.s32.totalorder %s265, %s268
      %p277 = scmp.eq.s32.totalorder %s40, 3
      %p278 = por %p276, %p277
      %p279 = scmp.ne.s32.totalorder %s268, %s269
      %p280 = scmp.eq.s32.totalorder %s40, 0
      %p281 = por %p279, %p280
      %p282 = scmp.ne.s32.totalorder %s268, %s269
      %p283 = scmp.eq.s32.totalorder %s41, 3
      %p284 = por %p282, %p283
      %p286 = scmp.ne.s32.totalorder %s269, %s285
      %p287 = scmp.eq.s32.totalorder %s41, 0
      %p288 = por %p286, %p287
      %s289 = ssub.s32 %s43, %s50
      %p290 = scmp.eq.s32.totalorder %s289, 0
      %s292 = sadd.s32 %s291, 1
      %s293 = scalar_select %p290, %s291, %s292
      %p296 = pneg %p290
      %p297 = scmp.eq.s32.totalorder %s35, 3
      %p298 = por %p296, %p297
      %p299 = scmp.ne.s32.totalorder %s291, %s294
      %p300 = scmp.eq.s32.totalorder %s35, 0
      %p301 = por %p299, %p300
      %p302 = scmp.ne.s32.totalorder %s291, %s294
      %p303 = scmp.eq.s32.totalorder %s40, 3
      %p304 = por %p302, %p303
      %p305 = scmp.ne.s32.totalorder %s294, %s295
      %p306 = scmp.eq.s32.totalorder %s40, 0
      %p307 = por %p305, %p306
      %p308 = scmp.ne.s32.totalorder %s294, %s295
      %p309 = scmp.eq.s32.totalorder %s41, 3
      %p310 = por %p308, %p309
      %p312 = scmp.ne.s32.totalorder %s295, %s311
      %p313 = scmp.eq.s32.totalorder %s41, 0
      %p314 = por %p312, %p313
      %s315 = ssub.s32 %s43, %s50
      %p316 = scmp.eq.s32.totalorder %s315, 0
      %s318 = sadd.s32 %s317, 1
      %s319 = scalar_select %p316, %s317, %s318
      %p322 = pneg %p316
      %p323 = scmp.eq.s32.totalorder %s35, 3
      %p324 = por %p322, %p323
      %p325 = scmp.ne.s32.totalorder %s317, %s320
      %p326 = scmp.eq.s32.totalorder %s35, 0
      %p327 = por %p325, %p326
      %p328 = scmp.ne.s32.totalorder %s317, %s320
      %p329 = scmp.eq.s32.totalorder %s40, 3
      %p330 = por %p328, %p329
      %p331 = scmp.ne.s32.totalorder %s320, %s321
      %p332 = scmp.eq.s32.totalorder %s40, 0
      %p333 = por %p331, %p332
      %p334 = scmp.ne.s32.totalorder %s320, %s321
      %p335 = scmp.eq.s32.totalorder %s41, 3
      %p336 = por %p334, %p335
      %p338 = scmp.ne.s32.totalorder %s321, %s337
      %p339 = scmp.eq.s32.totalorder %s41, 0
      %p340 = por %p338, %p339
      %s341 = ssub.s32 %s43, %s50
      %p342 = scmp.eq.s32.totalorder %s341, 0
      %s344 = sadd.s32 %s343, 1
      %s345 = scalar_select %p342, %s343, %s344
      %p348 = pneg %p342
      %p349 = scmp.eq.s32.totalorder %s35, 3
      %p350 = por %p348, %p349
      %p351 = scmp.ne.s32.totalorder %s343, %s346
      %p352 = scmp.eq.s32.totalorder %s35, 0
      %p353 = por %p351, %p352
      %p354 = scmp.ne.s32.totalorder %s343, %s346
      %p355 = scmp.eq.s32.totalorder %s40, 3
      %p356 = por %p354, %p355
      %p357 = scmp.ne.s32.totalorder %s346, %s347
      %p358 = scmp.eq.s32.totalorder %s40, 0
      %p359 = por %p357, %p358
      %p360 = scmp.ne.s32.totalorder %s346, %s347
      %p361 = scmp.eq.s32.totalorder %s41, 3
      %p362 = por %p360, %p361
      %p364 = scmp.ne.s32.totalorder %s347, %s363
      %p365 = scmp.eq.s32.totalorder %s41, 0
      %p366 = por %p364, %p365
      %s367 = ssub.s32 %s43, %s50
      %p368 = scmp.eq.s32.totalorder %s367, 0
      %s370 = sadd.s32 %s369, 1
      %s371 = scalar_select %p368, %s369, %s370
      %p374 = pneg %p368
      %p375 = scmp.eq.s32.totalorder %s35, 3
      %p376 = por %p374, %p375
      %p377 = scmp.ne.s32.totalorder %s369, %s372
      %p378 = scmp.eq.s32.totalorder %s35, 0
      %p379 = por %p377, %p378
      %p380 = scmp.ne.s32.totalorder %s369, %s372
      %p381 = scmp.eq.s32.totalorder %s40, 3
      %p382 = por %p380, %p381
      %p383 = scmp.ne.s32.totalorder %s372, %s373
      %p384 = scmp.eq.s32.totalorder %s40, 0
      %p385 = por %p383, %p384
      %p386 = scmp.ne.s32.totalorder %s372, %s373
      %p387 = scmp.eq.s32.totalorder %s41, 3
      %p388 = por %p386, %p387
      %p390 = scmp.ne.s32.totalorder %s373, %s389
      %p391 = scmp.eq.s32.totalorder %s41, 0
      %p392 = por %p390, %p391
      %s393 = ssub.s32 %s43, %s50
      %p394 = scmp.eq.s32.totalorder %s393, 0
      %s396 = sadd.s32 %s395, 1
      %s397 = scalar_select %p394, %s395, %s396
      %p400 = pneg %p394
      %p401 = scmp.eq.s32.totalorder %s35, 3
      %p402 = por %p400, %p401
      %p403 = scmp.ne.s32.totalorder %s395, %s398
      %p404 = scmp.eq.s32.totalorder %s35, 0
      %p405 = por %p403, %p404
      %p406 = scmp.ne.s32.totalorder %s395, %s398
      %p407 = scmp.eq.s32.totalorder %s40, 3
      %p408 = por %p406, %p407
      %p409 = scmp.ne.s32.totalorder %s398, %s399
      %p410 = scmp.eq.s32.totalorder %s40, 0
      %p411 = por %p409, %p410
      %p412 = scmp.ne.s32.totalorder %s398, %s399
      %p413 = scmp.eq.s32.totalorder %s41, 3
      %p414 = por %p412, %p413
      %p416 = scmp.ne.s32.totalorder %s399, %s415
      %p417 = scmp.eq.s32.totalorder %s41, 0
      %p418 = por %p416, %p417
      %s419 = ssub.s32 %s43, %s50
      %p420 = scmp.eq.s32.totalorder %s419, 0
      %s422 = sadd.s32 %s421, 1
      %s423 = scalar_select %p420, %s421, %s422
      %p426 = pneg %p420
      %p427 = scmp.eq.s32.totalorder %s35, 3
      %p428 = por %p426, %p427
      %p429 = scmp.ne.s32.totalorder %s421, %s424
      %p430 = scmp.eq.s32.totalorder %s35, 0
      %p431 = por %p429, %p430
      %p432 = scmp.ne.s32.totalorder %s421, %s424
      %p433 = scmp.eq.s32.totalorder %s40, 3
      %p434 = por %p432, %p433
      %p435 = scmp.ne.s32.totalorder %s424, %s425
      %p436 = scmp.eq.s32.totalorder %s40, 0
      %p437 = por %p435, %p436
      %p438 = scmp.ne.s32.totalorder %s424, %s425
      %p439 = scmp.eq.s32.totalorder %s41, 3
      %p440 = por %p438, %p439
      %p442 = scmp.ne.s32.totalorder %s425, %s441
      %p443 = scmp.eq.s32.totalorder %s41, 0
      %p444 = por %p442, %p443
      %s445 = ssub.s32 %s43, %s50
      %p446 = scmp.eq.s32.totalorder %s445, 0
      %s448 = sadd.s32 %s447, 1
      %s449 = scalar_select %p446, %s447, %s448
      %p452 = pneg %p446
      %p453 = scmp.eq.s32.totalorder %s35, 3
      %p454 = por %p452, %p453
      %p455 = scmp.ne.s32.totalorder %s447, %s450
      %p456 = scmp.eq.s32.totalorder %s35, 0
      %p457 = por %p455, %p456
      %p458 = scmp.ne.s32.totalorder %s447, %s450
      %p459 = scmp.eq.s32.totalorder %s40, 3
      %p460 = por %p458, %p459
      %p461 = scmp.ne.s32.totalorder %s450, %s451
      %p462 = scmp.eq.s32.totalorder %s40, 0
      %p463 = por %p461, %p462
      %p464 = scmp.ne.s32.totalorder %s450, %s451
      %p465 = scmp.eq.s32.totalorder %s41, 3
      %p466 = por %p464, %p465
      %p468 = scmp.ne.s32.totalorder %s451, %s467
      %p469 = scmp.eq.s32.totalorder %s41, 0
      %p470 = por %p468, %p469
      %s471 = ssub.s32 %s43, %s50
      %p472 = scmp.eq.s32.totalorder %s471, 0
      %s474 = sadd.s32 %s473, 1
      %s475 = scalar_select %p472, %s473, %s474
      %p478 = pneg %p472
      %p479 = scmp.eq.s32.totalorder %s35, 3
      %p480 = por %p478, %p479
      %p481 = scmp.ne.s32.totalorder %s473, %s476
      %p482 = scmp.eq.s32.totalorder %s35, 0
      %p483 = por %p481, %p482
      %p484 = scmp.ne.s32.totalorder %s473, %s476
      %p485 = scmp.eq.s32.totalorder %s40, 3
      %p486 = por %p484, %p485
      %p487 = scmp.ne.s32.totalorder %s476, %s477
      %p488 = scmp.eq.s32.totalorder %s40, 0
      %p489 = por %p487, %p488
      %p490 = scmp.ne.s32.totalorder %s476, %s477
      %p491 = scmp.eq.s32.totalorder %s41, 3
      %p492 = por %p490, %p491
      %p494 = scmp.ne.s32.totalorder %s477, %s493
      %p495 = scmp.eq.s32.totalorder %s41, 0
      %p496 = por %p494, %p495
      %s497 = ssub.s32 %s43, %s50
      %p498 = scmp.eq.s32.totalorder %s497, 0
      %s500 = sadd.s32 %s499, 1
      %s501 = scalar_select %p498, %s499, %s500
      %p504 = pneg %p498
      %p505 = scmp.eq.s32.totalorder %s35, 3
      %p506 = por %p504, %p505
      %p507 = scmp.ne.s32.totalorder %s499, %s502
      %p508 = scmp.eq.s32.totalorder %s35, 0
      %p509 = por %p507, %p508
      %p510 = scmp.ne.s32.totalorder %s499, %s502
      %p511 = scmp.eq.s32.totalorder %s40, 3
      %p512 = por %p510, %p511
      %p513 = scmp.ne.s32.totalorder %s502, %s503
      %p514 = scmp.eq.s32.totalorder %s40, 0
      %p515 = por %p513, %p514
      %p516 = scmp.ne.s32.totalorder %s502, %s503
      %p517 = scmp.eq.s32.totalorder %s41, 3
      %p518 = por %p516, %p517
      %p520 = scmp.ne.s32.totalorder %s503, %s519
      %p521 = scmp.eq.s32.totalorder %s41, 0
      %p522 = por %p520, %p521
      %s524 = sadd.s32 %s523, 1
      %p527 = scmp.eq.s32.totalorder %s35, 3
      %p528 = scmp.ne.s32.totalorder %s523, %s525
      %p529 = scmp.eq.s32.totalorder %s35, 0
      %p530 = por %p528, %p529
      %p531 = scmp.ne.s32.totalorder %s523, %s525
      %p532 = scmp.eq.s32.totalorder %s40, 3
      %p533 = por %p531, %p532
      %p534 = scmp.ne.s32.totalorder %s525, %s526
      %p535 = scmp.eq.s32.totalorder %s40, 0
      %p536 = por %p534, %p535
      %p537 = scmp.ne.s32.totalorder %s525, %s526
      %p538 = scmp.eq.s32.totalorder %s41, 3
      %p539 = por %p537, %p538
      %p541 = scmp.ne.s32.totalorder %s526, %s540
      %p542 = scmp.eq.s32.totalorder %s41, 0
      %p543 = por %p541, %p542
      %s545 = sadd.s32 %s544, 1
      %p548 = scmp.eq.s32.totalorder %s35, 3
      %p549 = scmp.ne.s32.totalorder %s544, %s546
      %p550 = scmp.eq.s32.totalorder %s35, 0
      %p551 = por %p549, %p550
      %p552 = scmp.ne.s32.totalorder %s544, %s546
      %p553 = scmp.eq.s32.totalorder %s40, 3
      %p554 = por %p552, %p553
      %p555 = scmp.ne.s32.totalorder %s546, %s547
      %p556 = scmp.eq.s32.totalorder %s40, 0
      %p557 = por %p555, %p556
      %p558 = scmp.ne.s32.totalorder %s546, %s547
      %p559 = scmp.eq.s32.totalorder %s41, 3
      %p560 = por %p558, %p559
      %p562 = scmp.ne.s32.totalorder %s547, %s561
      %p563 = scmp.eq.s32.totalorder %s41, 0
      %p564 = por %p562, %p563
      %s565 = ssub.s32 %s42, %s54
      %p566 = scmp.eq.s32.totalorder %s565, 0
      %s568 = sadd.s32 %s567, 1
      %s569 = scalar_select %p566, %s567, %s568
      %p572 = pneg %p566
      %p573 = scmp.eq.s32.totalorder %s35, 3
      %p574 = por %p572, %p573
      %p575 = scmp.ne.s32.totalorder %s567, %s570
      %p576 = scmp.eq.s32.totalorder %s35, 0
      %p577 = por %p575, %p576
      %p578 = scmp.ne.s32.totalorder %s567, %s570
      %p579 = scmp.eq.s32.totalorder %s40, 3
      %p580 = por %p578, %p579
      %p581 = scmp.ne.s32.totalorder %s570, %s571
      %p582 = scmp.eq.s32.totalorder %s40, 0
      %p583 = por %p581, %p582
      %p584 = scmp.ne.s32.totalorder %s570, %s571
      %p585 = scmp.eq.s32.totalorder %s41, 3
      %p586 = por %p584, %p585
      %p588 = scmp.ne.s32.totalorder %s571, %s587
      %p589 = scmp.eq.s32.totalorder %s41, 0
      %p590 = por %p588, %p589
      %p591 = scmp.le.s32.totalorder 1, %s35
      %p592 = scmp.lt.s32.totalorder %s35, 5
      %p593 = pnand %p591, %p592
      %p594 = pneg %p593
      // Predicated region
      $region9: #{tpu_custom_call.1} parent=5 // pred_check
        _
      $region10: #{tpu_custom_call.1} parent=5 // pred_check_branch
        %596 = sbr.rel (%p593) target = $region12
      $region11: #{tpu_custom_call.1} parent=5 // pred_region
        %s597 = ssub.s32 %s35, 1
        // Predicated region
        $region13: #{tpu_custom_call.1} parent=11 // pred_check
          %p598 = pneg %p536
        $region14: #{tpu_custom_call.1} parent=11 // pred_check_branch
          %600 = sbr.rel (%p598) target = $region16
        $region15: #{tpu_custom_call.1} parent=11 // pred_region
          _
        $region16: #{tpu_custom_call.1} parent=11 // pred_fallthru
          _
        // Predicated region
        $region17: #{tpu_custom_call.1} parent=11 // pred_check
          %p601 = pneg %p557
        $region18: #{tpu_custom_call.1} parent=11 // pred_check_branch
          %603 = sbr.rel (%p601) target = $region20
        $region19: #{tpu_custom_call.1} parent=11 // pred_region
          _
        $region20: #{tpu_custom_call.1} parent=11 // pred_fallthru
          _
      $region12: #{tpu_custom_call.1} parent=5 // pred_fallthru
        _
      %p604 = scmp.lt.s32.totalorder %s35, 4
      // Predicated region
      $region21: #{tpu_custom_call.1} parent=5 // pred_check
        %p605 = pneg %p604
      $region22: #{tpu_custom_call.1} parent=5 // pred_check_branch
        %607 = sbr.rel (%p605) target = $region24
      $region23: #{tpu_custom_call.1} parent=5 // pred_region
        // Predicated region
        $region25: #{tpu_custom_call.1} parent=23 // pred_check
          %p608 = pneg %p67
        $region26: #{tpu_custom_call.1} parent=23 // pred_check_branch
          %610 = sbr.rel (%p608) target = $region28
        $region27: #{tpu_custom_call.1} parent=23 // pred_region
          %s611 = sand.u32 %s57, 1
          %s612 = scalar_lea.sflag [#allocation4], %s611
          %s613 = sand.u32 %s57, 1
          %s614 = smul.addr %s613, 8
          %s615 = scalar_lea.vmem [#allocation3], %s614
          %s617 = ssub.s32 128, 128
          %618 = vsyncadd %s612, %s617
          %s619 = smul.addr %s42, 128
          %s620 = scalar_lea.hbm %s0, %s619
          %s622 = sshll.u32 %s615, 4
          %s623 = int_to_ptr.vmem [resolvable:$true] %s622
          %625 = dma.hbm_to_vmem [thread:$0]  %s620, 128, %s623, %s612
        $region28: #{tpu_custom_call.1} parent=23 // pred_fallthru
          _
        // Predicated region
        $region29: #{tpu_custom_call.1} parent=23 // pred_check
          %p626 = pneg %p93
        $region30: #{tpu_custom_call.1} parent=23 // pred_check_branch
          %628 = sbr.rel (%p626) target = $region32
        $region31: #{tpu_custom_call.1} parent=23 // pred_region
          %p629 = scmp.lt.s32.totalorder %s42, 1
          %s630 = scalar_select %p629, %s42, 1
          %s631 = scalar_lea.vmem %s1, %s630
        $region32: #{tpu_custom_call.1} parent=23 // pred_fallthru
          _
        // Predicated region
        $region33: #{tpu_custom_call.1} parent=23 // pred_check
          %p632 = pneg %p119
        $region34: #{tpu_custom_call.1} parent=23 // pred_check_branch
          %634 = sbr.rel (%p632) target = $region36
        $region35: #{tpu_custom_call.1} parent=23 // pred_region
          %p635 = scmp.lt.s32.totalorder %s43, 1
          %s636 = scalar_select %p635, %s43, 1
          %s637 = scalar_lea.vmem %s2, %s636
        $region36: #{tpu_custom_call.1} parent=23 // pred_fallthru
          _
        // Predicated region
        $region37: #{tpu_custom_call.1} parent=23 // pred_check
          %p638 = pneg %p145
        $region38: #{tpu_custom_call.1} parent=23 // pred_check_branch
          %640 = sbr.rel (%p638) target = $region40
        $region39: #{tpu_custom_call.1} parent=23 // pred_region
          %p641 = scmp.lt.s32.totalorder %s43, 1
          %s642 = scalar_select %p641, %s43, 1
          %s643 = scalar_lea.vmem %s3, %s642
        $region40: #{tpu_custom_call.1} parent=23 // pred_fallthru
          _
        // Predicated region
        $region41: #{tpu_custom_call.1} parent=23 // pred_check
          %p644 = pneg %p171
        $region42: #{tpu_custom_call.1} parent=23 // pred_check_branch
          %646 = sbr.rel (%p644) target = $region44
        $region43: #{tpu_custom_call.1} parent=23 // pred_region
          %p647 = scmp.lt.s32.totalorder %s43, 1
          %s648 = scalar_select %p647, %s43, 1
          %s649 = smul.addr %s648, 4
          %s650 = smul.addr %s649, 4
          %s651 = scalar_lea.vmem %s4, %s650
        $region44: #{tpu_custom_call.1} parent=23 // pred_fallthru
          _
        // Predicated region
        $region45: #{tpu_custom_call.1} parent=23 // pred_check
          %p652 = pneg %p197
        $region46: #{tpu_custom_call.1} parent=23 // pred_check_branch
          %654 = sbr.rel (%p652) target = $region48
        $region47: #{tpu_custom_call.1} parent=23 // pred_region
          %p655 = scmp.lt.s32.totalorder %s43, 1
          %s656 = scalar_select %p655, %s43, 1
          %s657 = scalar_lea.vmem %s5, %s656
        $region48: #{tpu_custom_call.1} parent=23 // pred_fallthru
          _
        // Predicated region
        $region49: #{tpu_custom_call.1} parent=23 // pred_check
          %p658 = pneg %p223
        $region50: #{tpu_custom_call.1} parent=23 // pred_check_branch
          %660 = sbr.rel (%p658) target = $region52
        $region51: #{tpu_custom_call.1} parent=23 // pred_region
          %p661 = scmp.lt.s32.totalorder %s43, 1
          %s662 = scalar_select %p661, %s43, 1
          %s663 = smul.addr %s662, 4
          %s664 = smul.addr %s663, 4
          %s665 = scalar_lea.vmem %s6, %s664
        $region52: #{tpu_custom_call.1} parent=23 // pred_fallthru
          _
        // Predicated region
        $region53: #{tpu_custom_call.1} parent=23 // pred_check
          %p666 = pneg %p249
        $region54: #{tpu_custom_call.1} parent=23 // pred_check_branch
          %668 = sbr.rel (%p666) target = $region56
        $region55: #{tpu_custom_call.1} parent=23 // pred_region
          %p669 = scmp.lt.s32.totalorder %s43, 1
          %s670 = scalar_select %p669, %s43, 1
          %s671 = scalar_lea.vmem %s7, %s670
        $region56: #{tpu_custom_call.1} parent=23 // pred_fallthru
          _
        // Predicated region
        $region57: #{tpu_custom_call.1} parent=23 // pred_check
          %p672 = pneg %p275
        $region58: #{tpu_custom_call.1} parent=23 // pred_check_branch
          %674 = sbr.rel (%p672) target = $region60
        $region59: #{tpu_custom_call.1} parent=23 // pred_region
          %p675 = scmp.lt.s32.totalorder %s43, 1
          %s676 = scalar_select %p675, %s43, 1
          %s677 = smul.addr %s676, 4
          %s678 = smul.addr %s677, 4
          %s679 = scalar_lea.vmem %s8, %s678
        $region60: #{tpu_custom_call.1} parent=23 // pred_fallthru
          _
        // Predicated region
        $region61: #{tpu_custom_call.1} parent=23 // pred_check
          %p680 = pneg %p301
        $region62: #{tpu_custom_call.1} parent=23 // pred_check_branch
          %682 = sbr.rel (%p680) target = $region64
        $region63: #{tpu_custom_call.1} parent=23 // pred_region
          %p683 = scmp.lt.s32.totalorder %s43, 1
          %s684 = scalar_select %p683, %s43, 1
          %s685 = scalar_lea.vmem %s9, %s684
        $region64: #{tpu_custom_call.1} parent=23 // pred_fallthru
          _
        // Predicated region
        $region65: #{tpu_custom_call.1} parent=23 // pred_check
          %p686 = pneg %p327
        $region66: #{tpu_custom_call.1} parent=23 // pred_check_branch
          %688 = sbr.rel (%p686) target = $region68
        $region67: #{tpu_custom_call.1} parent=23 // pred_region
          %s689 = sand.u32 %s35, 1
          %s690 = scalar_lea.sflag [#allocation7], %s689
          %s691 = sand.u32 %s317, 1
          %s692 = smul.addr %s691, 16
          %s693 = scalar_lea.vmem [#allocation6], %s692
          %s695 = ssub.s32 256, 256
          %696 = vsyncadd %s690, %s695
          %s697 = smul.addr %s43, 4
          %s698 = smul.addr %s697, 64
          %s699 = scalar_lea.hbm %s10, %s698
          %s700 = sshll.u32 %s693, 4
          %s701 = int_to_ptr.vmem [resolvable:$true] %s700
          %706 = dma.hbm_to_vmem [thread:$0]  %s699, 256, %s701, %s690, 64, 64, 4
        $region68: #{tpu_custom_call.1} parent=23 // pred_fallthru
          _
        // Predicated region
        $region69: #{tpu_custom_call.1} parent=23 // pred_check
          %p707 = pneg %p353
        $region70: #{tpu_custom_call.1} parent=23 // pred_check_branch
          %709 = sbr.rel (%p707) target = $region72
        $region71: #{tpu_custom_call.1} parent=23 // pred_region
          %p710 = scmp.lt.s32.totalorder %s43, 1
          %s711 = scalar_select %p710, %s43, 1
          %s712 = scalar_lea.vmem %s11, %s711
        $region72: #{tpu_custom_call.1} parent=23 // pred_fallthru
          _
        // Predicated region
        $region73: #{tpu_custom_call.1} parent=23 // pred_check
          %p713 = pneg %p379
        $region74: #{tpu_custom_call.1} parent=23 // pred_check_branch
          %715 = sbr.rel (%p713) target = $region76
        $region75: #{tpu_custom_call.1} parent=23 // pred_region
          %p716 = scmp.lt.s32.totalorder %s43, 1
          %s717 = scalar_select %p716, %s43, 1
          %s718 = scalar_lea.vmem %s12, %s717
        $region76: #{tpu_custom_call.1} parent=23 // pred_fallthru
          _
        // Predicated region
        $region77: #{tpu_custom_call.1} parent=23 // pred_check
          %p719 = pneg %p405
        $region78: #{tpu_custom_call.1} parent=23 // pred_check_branch
          %721 = sbr.rel (%p719) target = $region80
        $region79: #{tpu_custom_call.1} parent=23 // pred_region
          %p722 = scmp.lt.s32.totalorder %s43, 1
          %s723 = scalar_select %p722, %s43, 1
          %s724 = scalar_lea.vmem %s13, %s723
        $region80: #{tpu_custom_call.1} parent=23 // pred_fallthru
          _
        // Predicated region
        $region81: #{tpu_custom_call.1} parent=23 // pred_check
          %p725 = pneg %p431
        $region82: #{tpu_custom_call.1} parent=23 // pred_check_branch
          %727 = sbr.rel (%p725) target = $region84
        $region83: #{tpu_custom_call.1} parent=23 // pred_region
          %s728 = sand.u32 %s35, 1
          %s729 = scalar_lea.sflag [#allocation7], %s728
          %s730 = sand.u32 %s421, 1
          %s731 = smul.addr %s730, 16
          %s732 = scalar_lea.vmem [#allocation8], %s731
          %s734 = ssub.s32 256, 256
          %735 = vsyncadd %s729, %s734
          %s736 = smul.addr %s43, 4
          %s737 = smul.addr %s736, 64
          %s738 = scalar_lea.hbm %s14, %s737
          %s739 = sshll.u32 %s732, 4
          %s740 = int_to_ptr.vmem [resolvable:$true] %s739
          %745 = dma.hbm_to_vmem [thread:$0]  %s738, 256, %s740, %s729, 64, 64, 4
        $region84: #{tpu_custom_call.1} parent=23 // pred_fallthru
          _
        // Predicated region
        $region85: #{tpu_custom_call.1} parent=23 // pred_check
          %p746 = pneg %p457
        $region86: #{tpu_custom_call.1} parent=23 // pred_check_branch
          %748 = sbr.rel (%p746) target = $region88
        $region87: #{tpu_custom_call.1} parent=23 // pred_region
          %p749 = scmp.lt.s32.totalorder %s43, 1
          %s750 = scalar_select %p749, %s43, 1
          %s751 = scalar_lea.vmem %s15, %s750
        $region88: #{tpu_custom_call.1} parent=23 // pred_fallthru
          _
        // Predicated region
        $region89: #{tpu_custom_call.1} parent=23 // pred_check
          %p752 = pneg %p483
        $region90: #{tpu_custom_call.1} parent=23 // pred_check_branch
          %754 = sbr.rel (%p752) target = $region92
        $region91: #{tpu_custom_call.1} parent=23 // pred_region
          %p755 = scmp.lt.s32.totalorder %s43, 1
          %s756 = scalar_select %p755, %s43, 1
          %s757 = smul.addr %s756, 8
          %s758 = smul.addr %s757, 4
          %s759 = scalar_lea.vmem %s16, %s758
        $region92: #{tpu_custom_call.1} parent=23 // pred_fallthru
          _
        // Predicated region
        $region93: #{tpu_custom_call.1} parent=23 // pred_check
          %p760 = pneg %p509
        $region94: #{tpu_custom_call.1} parent=23 // pred_check_branch
          %762 = sbr.rel (%p760) target = $region96
        $region95: #{tpu_custom_call.1} parent=23 // pred_region
          %p763 = scmp.lt.s32.totalorder %s43, 1
          %s764 = scalar_select %p763, %s43, 1
          %s765 = scalar_lea.vmem %s17, %s764
        $region96: #{tpu_custom_call.1} parent=23 // pred_fallthru
          _
      $region24: #{tpu_custom_call.1} parent=5 // pred_fallthru
        _
      %p766 = scmp.le.s32.totalorder 1, %s35
      %p767 = scmp.lt.s32.totalorder %s35, 5
      %p768 = pnand %p766, %p767
      %p769 = pneg %p768
      // Predicated region
      $region97: #{tpu_custom_call.1} parent=5 // pred_check
        _
      $region98: #{tpu_custom_call.1} parent=5 // pred_check_branch
        %771 = sbr.rel (%p768) target = $region100
      $region99: #{tpu_custom_call.1} parent=5 // pred_region
        %s772 = ssub.s32 %s35, 1
        %s773 = sand.u32 %s60, 1
        %s774 = scalar_lea.sflag [#allocation4], %s773
        %s775 = sand.u32 %s60, 1
        %s776 = smul.addr %s775, 8
        %s777 = scalar_lea.vmem [#allocation3], %s776
        // Predicated region
        $region101: #{tpu_custom_call.1} parent=99 // pred_check
          %p778 = pneg %p73
        $region102: #{tpu_custom_call.1} parent=99 // pred_check_branch
          %780 = sbr.rel (%p778) target = $region104
        $region103: #{tpu_custom_call.1} parent=99 // pred_region
          %781 = dma.done %s774, 128
        $region104: #{tpu_custom_call.1} parent=99 // pred_fallthru
          _
        %s782 = sand.u32 %s40, 1
        %s783 = scalar_lea.sflag [#allocation7], %s782
        %s784 = sand.u32 %s320, 1
        %s785 = smul.addr %s784, 16
        %s786 = scalar_lea.vmem [#allocation6], %s785
        // Predicated region
        $region105: #{tpu_custom_call.1} parent=99 // pred_check
          %p787 = pneg %p333
        $region106: #{tpu_custom_call.1} parent=99 // pred_check_branch
          %789 = sbr.rel (%p787) target = $region108
        $region107: #{tpu_custom_call.1} parent=99 // pred_region
          %790 = dma.done %s783, 256
        $region108: #{tpu_custom_call.1} parent=99 // pred_fallthru
          _
        %s791 = sand.u32 %s40, 1
        %s792 = scalar_lea.sflag [#allocation7], %s791
        %s793 = sand.u32 %s424, 1
        %s794 = smul.addr %s793, 16
        %s795 = scalar_lea.vmem [#allocation8], %s794
        // Predicated region
        $region109: #{tpu_custom_call.1} parent=99 // pred_check
          %p796 = pneg %p437
        $region110: #{tpu_custom_call.1} parent=99 // pred_check_branch
          %798 = sbr.rel (%p796) target = $region112
        $region111: #{tpu_custom_call.1} parent=99 // pred_region
          %799 = dma.done %s792, 256
        $region112: #{tpu_custom_call.1} parent=99 // pred_fallthru
          _
        %s800 = sand.u32 %s60, 1
        %s801 = scalar_lea.sflag [#allocation4], %s800
        %s802 = sand.u32 %s60, 1
        %s803 = smul.addr %s802, 8
        %s804 = scalar_lea.vmem [#allocation3], %s803
        %p805 = pneg %p73
        %p806 = pneg %p70
        %p807 = scmp.lt.s32.totalorder %s44, 1
        %s808 = scalar_select %p807, %s44, 1
        %s809 = scalar_lea.vmem %s1, %s808
        %p810 = pneg %p99
        %p811 = pneg %p96
        %p812 = scmp.lt.s32.totalorder %s45, 1
        %s813 = scalar_select %p812, %s45, 1
        %s814 = scalar_lea.vmem %s2, %s813
        %p815 = pneg %p125
        %p816 = pneg %p122
        %p817 = scmp.lt.s32.totalorder %s45, 1
        %s818 = scalar_select %p817, %s45, 1
        %s819 = scalar_lea.vmem %s3, %s818
        %p820 = pneg %p151
        %p821 = pneg %p148
        %p822 = scmp.lt.s32.totalorder %s45, 1
        %s823 = scalar_select %p822, %s45, 1
        %s824 = smul.addr %s823, 4
        %s825 = smul.addr %s824, 4
        %s826 = scalar_lea.vmem %s4, %s825
        %p827 = pneg %p177
        %p828 = pneg %p174
        %p829 = scmp.lt.s32.totalorder %s45, 1
        %s830 = scalar_select %p829, %s45, 1
        %s831 = scalar_lea.vmem %s5, %s830
        %p832 = pneg %p203
        %p833 = pneg %p200
        %p834 = scmp.lt.s32.totalorder %s45, 1
        %s835 = scalar_select %p834, %s45, 1
        %s836 = smul.addr %s835, 4
        %s837 = smul.addr %s836, 4
        %s838 = scalar_lea.vmem %s6, %s837
        %p839 = pneg %p229
        %p840 = pneg %p226
        %p841 = scmp.lt.s32.totalorder %s45, 1
        %s842 = scalar_select %p841, %s45, 1
        %s843 = scalar_lea.vmem %s7, %s842
        %p844 = pneg %p255
        %p845 = pneg %p252
        %p846 = scmp.lt.s32.totalorder %s45, 1
        %s847 = scalar_select %p846, %s45, 1
        %s848 = smul.addr %s847, 4
        %s849 = smul.addr %s848, 4
        %s850 = scalar_lea.vmem %s8, %s849
        %p851 = pneg %p281
        %p852 = pneg %p278
        %p853 = scmp.lt.s32.totalorder %s45, 1
        %s854 = scalar_select %p853, %s45, 1
        %s855 = scalar_lea.vmem %s9, %s854
        %p856 = pneg %p307
        %p857 = pneg %p304
        %s858 = sand.u32 %s40, 1
        %s859 = scalar_lea.sflag [#allocation7], %s858
        %s860 = sand.u32 %s320, 1
        %s861 = smul.addr %s860, 16
        %s862 = scalar_lea.vmem [#allocation6], %s861
        %p863 = pneg %p333
        %p864 = pneg %p330
        %p865 = scmp.lt.s32.totalorder %s45, 1
        %s866 = scalar_select %p865, %s45, 1
        %s867 = scalar_lea.vmem %s11, %s866
        %p868 = pneg %p359
        %p869 = pneg %p356
        %p870 = scmp.lt.s32.totalorder %s45, 1
        %s871 = scalar_select %p870, %s45, 1
        %s872 = scalar_lea.vmem %s12, %s871
        %p873 = pneg %p385
        %p874 = pneg %p382
        %p875 = scmp.lt.s32.totalorder %s45, 1
        %s876 = scalar_select %p875, %s45, 1
        %s877 = scalar_lea.vmem %s13, %s876
        %p878 = pneg %p411
        %p879 = pneg %p408
        %s880 = sand.u32 %s40, 1
        %s881 = scalar_lea.sflag [#allocation7], %s880
        %s882 = sand.u32 %s424, 1
        %s883 = smul.addr %s882, 16
        %s884 = scalar_lea.vmem [#allocation8], %s883
        %p885 = pneg %p437
        %p886 = pneg %p434
        %p887 = scmp.lt.s32.totalorder %s45, 1
        %s888 = scalar_select %p887, %s45, 1
        %s889 = scalar_lea.vmem %s15, %s888
        %p890 = pneg %p463
        %p891 = pneg %p460
        %p892 = scmp.lt.s32.totalorder %s45, 1
        %s893 = scalar_select %p892, %s45, 1
        %s894 = smul.addr %s893, 8
        %s895 = smul.addr %s894, 4
        %s896 = scalar_lea.vmem %s16, %s895
        %p897 = pneg %p489
        %p898 = pneg %p486
        %p899 = scmp.lt.s32.totalorder %s45, 1
        %s900 = scalar_select %p899, %s45, 1
        %s901 = scalar_lea.vmem %s17, %s900
        %p902 = pneg %p515
        %p903 = pneg %p512
        %p904 = pneg %p536
        %p905 = pneg %p533
        %p906 = pneg %p557
        %p907 = pneg %p554
        %p908 = pneg %p583
        %p909 = pneg %p580
        %s910 = sand.u32 %s570, 1
        %s911 = scalar_lea.sflag [#allocation5], %s910
        %s912 = sand.u32 %s570, 1
        %s913 = smul.addr %s912, 8
        %s914 = scalar_lea.vmem [#allocation9], %s913
        %p915 = scmp.lt.s32.totalorder %s44, 1
        %s916 = scalar_select %p915, %s44, 1
        %s917 = scalar_lea.vmem %s1, %s916
        %p918 = scmp.lt.s32.totalorder %s45, 1
        %s919 = scalar_select %p918, %s45, 1
        %s920 = scalar_lea.vmem %s2, %s919
        %p921 = scmp.lt.s32.totalorder %s45, 1
        %s922 = scalar_select %p921, %s45, 1
        %s923 = scalar_lea.vmem %s3, %s922
        %p924 = scmp.lt.s32.totalorder %s45, 1
        %s925 = scalar_select %p924, %s45, 1
        %s926 = smul.addr %s925, 4
        %s927 = smul.addr %s926, 4
        %s928 = scalar_lea.vmem %s4, %s927
        %p929 = scmp.lt.s32.totalorder %s45, 1
        %s930 = scalar_select %p929, %s45, 1
        %s931 = scalar_lea.vmem %s5, %s930
        %p932 = scmp.lt.s32.totalorder %s45, 1
        %s933 = scalar_select %p932, %s45, 1
        %s934 = smul.addr %s933, 4
        %s935 = smul.addr %s934, 4
        %s936 = scalar_lea.vmem %s6, %s935
        %p937 = scmp.lt.s32.totalorder %s45, 1
        %s938 = scalar_select %p937, %s45, 1
        %s939 = scalar_lea.vmem %s7, %s938
        %p940 = scmp.lt.s32.totalorder %s45, 1
        %s941 = scalar_select %p940, %s45, 1
        %s942 = smul.addr %s941, 4
        %s943 = smul.addr %s942, 4
        %s944 = scalar_lea.vmem %s8, %s943
        %p945 = scmp.lt.s32.totalorder %s45, 1
        %s946 = scalar_select %p945, %s45, 1
        %s947 = scalar_lea.vmem %s9, %s946
        %p948 = scmp.lt.s32.totalorder %s45, 1
        %s949 = scalar_select %p948, %s45, 1
        %s950 = scalar_lea.vmem %s11, %s949
        %p951 = scmp.lt.s32.totalorder %s45, 1
        %s952 = scalar_select %p951, %s45, 1
        %s953 = scalar_lea.vmem %s12, %s952
        %p954 = scmp.lt.s32.totalorder %s45, 1
        %s955 = scalar_select %p954, %s45, 1
        %s956 = scalar_lea.vmem %s13, %s955
        %p957 = scmp.lt.s32.totalorder %s45, 1
        %s958 = scalar_select %p957, %s45, 1
        %s959 = scalar_lea.vmem %s15, %s958
        %p960 = scmp.lt.s32.totalorder %s45, 1
        %s961 = scalar_select %p960, %s45, 1
        %s962 = smul.addr %s961, 8
        %s963 = smul.addr %s962, 4
        %s964 = scalar_lea.vmem %s16, %s963
        %p965 = scmp.lt.s32.totalorder %s45, 1
        %s966 = scalar_select %p965, %s45, 1
        %s967 = scalar_lea.vmem %s17, %s966
        %p969 = scmp.eq.s32.totalorder %s45, 0
        // Predicated region
        $region113: #{tpu_custom_call.1} parent=99 // pred_check
          %p970 = pneg %p969
        $region114: #{tpu_custom_call.1} parent=99 // pred_check_branch
          %972 = sbr.rel (%p970) target = $region116
        $region115: #{tpu_custom_call.1} parent=99 // pred_region
          %v973 = vld [vmem:[%s777] sm:$0xff]
          %vm974 = vcmask 261120
          %975 = vst.msk [vmem:[#allocation2] sm:$0xff] %vm974, %v973
        $region116: #{tpu_custom_call.1} parent=99 // pred_fallthru
          _
        %v976 = vld [vmem:[#allocation2] sm:$0xff]
        %v977 = vld [vmem:[%s917] sm:$0x1]
        %vm978 = vcmp.eq.f32.partialorder %v977, 0.0
        %v979 = vsel %vm978, -1e+09, 0.0
        %v980 = vld [vmem:[%s920] sm:$0x1]
        %v981 = vld [vmem:[%s923] sm:$0x1]
        %vm982 = vcmask 261120
        %v983 = vsel %vm982, %v976, 0.0
        %984 = vadd.xlane.f32.xlu0 %v983
        %v985 = vpop.xlane.xlu0 %984
        %v986 = vrcp.pop 32.0
        %v987 = vmul.f32 %v985, %v986
        %v988 = vsub.f32 %v976, %v987
        %v989 = vmul.f32 %v988, %v988
        %v990 = vsel %vm982, %v989, 0.0
        %991 = vadd.xlane.f32.xlu0 %v990
        %v992 = vpop.xlane.xlu0 %991
        %v993 = vmul.f32 %v992, %v986
        %v994 = vadd.f32 %v993, 1e-05
        %v995 = vrsqrt.pop %v994
        %v996 = vmul.f32 %v988, %v995
        %v998 = vlaneseq
        %v999 = vshrl.u32 %v998, 7
        %v1000 = vsub.s32 0, %v999
        %v1001 = vrot.slane %v980, %v1000
        %v1003 = vmul.f32 %v996, %v1001
        %v1005 = vlaneseq
        %v1006 = vshrl.u32 %v1005, 7
        %v1007 = vsub.s32 0, %v1006
        %v1008 = vrot.slane %v981, %v1007
        %v1010 = vadd.f32 %v1003, %v1008
        %v1011 = vpack.c.bf16 %v1010, %v1010
        %v1012 = vld [vmem:[%s928] sm:$0xf]
        %v1013 = vld [vmem:[%s928 + $0x4] sm:$0xf]
        %v1014 = vld [vmem:[%s928 + $0x8] sm:$0xf]
        %v1015 = vld [vmem:[%s928 + $0xc] sm:$0xf]
        %v1016 = vld [vmem:[%s931] sm:$0x1]
        %v1018 = vlaneseq
        %v1019 = vshrl.u32 %v1018, 7
        %v1020 = vsub.s32 0, %v1019
        %v1021 = vrot.slane %v1016, %v1020
        %v1027 = vunpack.c.l.b16 %v1012
        %v1028 = vunpack.c.l.b16 %v1013
        %v1029 = vunpack.c.l.b16 %v1014
        %v1030 = vunpack.c.l.b16 %v1015
        %v1031 = vpack.c.b16 %v1028, %v1027
        %v1032 = vpack.c.b16 %v1030, %v1029
        %v1036 = vsel %vm982, %v1011, 0
        %1038 = vmatprep.subr.bf16.mxu0 0
        %1039 = vmatpush1.bf16.msra.mxu0 %v1031
        %1040 = vmatprep.subr.bf16.mxu0 0
        %1041 = vmatpush1.bf16.msra.mxu0 %v1032
        %1042 = vmatprep.subr.bf16.mxu0 0
        %1043 = vmatpush1.bf16.msra.mxu0 0
        %1044 = vmatprep.subr.bf16.mxu0 0
        %1045 = vmatpush1.bf16.msra.mxu0 0
        %1046 = vmatprep.subr.bf16.mxu0 0
        %1047 = vmatpush1.bf16.msra.mxu0 0
        %1048 = vmatprep.subr.bf16.mxu0 0
        %1049 = vmatpush1.bf16.msra.mxu0 0
        %1050 = vmatprep.subr.bf16.mxu0 0
        %1051 = vmatpush1.bf16.msra.mxu0 0
        %1052 = vmatprep.subr.bf16.mxu0 0
        %1053 = vmatpush1.bf16.msra.mxu0 0
        %1054 = vmatprep.subr.bf16.mxu0 0
        %1055 = vmatpush1.bf16.msra.mxu0 0
        %1056 = vmatprep.subr.bf16.mxu0 0
        %1057 = vmatpush1.bf16.msra.mxu0 0
        %1058 = vmatprep.subr.bf16.mxu0 0
        %1059 = vmatpush1.bf16.msra.mxu0 0
        %1060 = vmatprep.subr.bf16.mxu0 0
        %1061 = vmatpush1.bf16.msra.mxu0 0
        %1062 = vmatprep.subr.bf16.mxu0 0
        %1063 = vmatpush1.bf16.msra.mxu0 0
        %1064 = vmatprep.subr.bf16.mxu0 0
        %1065 = vmatpush1.bf16.msra.mxu0 0
        %1066 = vmatprep.subr.bf16.mxu0 0
        %1067 = vmatpush1.bf16.msra.mxu0 0
        %1068 = vmatprep.subr.bf16.mxu0 0
        %1069 = vmatpush1.bf16.msra.mxu0 0
        %1070 = vmatprep.mubr.bf16.mxu0 0
        %1071 = vmatmul.mubr.bf16.gmra.mrb[0].mxu0 %v1036
        %v1072 = vpop.f32.mrb[0].mxu0
        %v1073 = vadd.f32 %v1021, %v1072
        %v1074 = vpop.f32.mrb[0].mxu0
        %v1075 = vpop.f32.mrb[0].mxu0
        %v1076 = vpop.f32.mrb[0].mxu0
        %1077 = vdwg.mxu0
        %v1078 = vld [vmem:[%s936] sm:$0xf]
        %v1079 = vld [vmem:[%s936 + $0x4] sm:$0xf]
        %v1080 = vld [vmem:[%s936 + $0x8] sm:$0xf]
        %v1081 = vld [vmem:[%s936 + $0xc] sm:$0xf]
        %v1082 = vld [vmem:[%s939] sm:$0x1]
        %v1084 = vlaneseq
        %v1085 = vshrl.u32 %v1084, 7
        %v1086 = vsub.s32 0, %v1085
        %v1087 = vrot.slane %v1082, %v1086
        %v1093 = vunpack.c.l.b16 %v1078
        %v1094 = vunpack.c.l.b16 %v1079
        %v1095 = vunpack.c.l.b16 %v1080
        %v1096 = vunpack.c.l.b16 %v1081
        %v1097 = vpack.c.b16 %v1094, %v1093
        %v1098 = vpack.c.b16 %v1096, %v1095
        %1101 = vmatprep.subr.bf16.mxu0 0
        %1102 = vmatpush1.bf16.msra.mxu0 %v1097
        %1103 = vmatprep.subr.bf16.mxu0 0
        %1104 = vmatpush1.bf16.msra.mxu0 %v1098
        %1105 = vmatprep.subr.bf16.mxu0 0
        %1106 = vmatpush1.bf16.msra.mxu0 0
        %1107 = vmatprep.subr.bf16.mxu0 0
        %1108 = vmatpush1.bf16.msra.mxu0 0
        %1109 = vmatprep.subr.bf16.mxu0 0
        %1110 = vmatpush1.bf16.msra.mxu0 0
        %1111 = vmatprep.subr.bf16.mxu0 0
        %1112 = vmatpush1.bf16.msra.mxu0 0
        %1113 = vmatprep.subr.bf16.mxu0 0
        %1114 = vmatpush1.bf16.msra.mxu0 0
        %1115 = vmatprep.subr.bf16.mxu0 0
        %1116 = vmatpush1.bf16.msra.mxu0 0
        %1117 = vmatprep.subr.bf16.mxu0 0
        %1118 = vmatpush1.bf16.msra.mxu0 0
        %1119 = vmatprep.subr.bf16.mxu0 0
        %1120 = vmatpush1.bf16.msra.mxu0 0
        %1121 = vmatprep.subr.bf16.mxu0 0
        %1122 = vmatpush1.bf16.msra.mxu0 0
        %1123 = vmatprep.subr.bf16.mxu0 0
        %1124 = vmatpush1.bf16.msra.mxu0 0
        %1125 = vmatprep.subr.bf16.mxu0 0
        %1126 = vmatpush1.bf16.msra.mxu0 0
        %1127 = vmatprep.subr.bf16.mxu0 0
        %1128 = vmatpush1.bf16.msra.mxu0 0
        %1129 = vmatprep.subr.bf16.mxu0 0
        %1130 = vmatpush1.bf16.msra.mxu0 0
        %1131 = vmatprep.subr.bf16.mxu0 0
        %1132 = vmatpush1.bf16.msra.mxu0 0
        %1133 = vmatprep.mubr.bf16.mxu0 0
        %1134 = vmatmul.mubr.bf16.gmra.mrb[0].mxu0 %v1036
        %v1135 = vpop.f32.mrb[0].mxu0
        %v1136 = vadd.f32 %v1087, %v1135
        %v1137 = vpop.f32.mrb[0].mxu0
        %v1138 = vpop.f32.mrb[0].mxu0
        %v1139 = vpop.f32.mrb[0].mxu0
        %1140 = vdwg.mxu0
        %v1141 = vld [vmem:[%s944] sm:$0xf]
        %v1142 = vld [vmem:[%s944 + $0x4] sm:$0xf]
        %v1143 = vld [vmem:[%s944 + $0x8] sm:$0xf]
        %v1144 = vld [vmem:[%s944 + $0xc] sm:$0xf]
        %v1145 = vld [vmem:[%s947] sm:$0x1]
        %v1147 = vlaneseq
        %v1148 = vshrl.u32 %v1147, 7
        %v1149 = vsub.s32 0, %v1148
        %v1150 = vrot.slane %v1145, %v1149
        %v1156 = vunpack.c.l.b16 %v1141
        %v1157 = vunpack.c.l.b16 %v1142
        %v1158 = vunpack.c.l.b16 %v1143
        %v1159 = vunpack.c.l.b16 %v1144
        %v1160 = vpack.c.b16 %v1157, %v1156
        %v1161 = vpack.c.b16 %v1159, %v1158
        %1164 = vmatprep.subr.bf16.mxu0 0
        %1165 = vmatpush1.bf16.msra.mxu0 %v1160
        %1166 = vmatprep.subr.bf16.mxu0 0
        %1167 = vmatpush1.bf16.msra.mxu0 %v1161
        %1168 = vmatprep.subr.bf16.mxu0 0
        %1169 = vmatpush1.bf16.msra.mxu0 0
        %1170 = vmatprep.subr.bf16.mxu0 0
        %1171 = vmatpush1.bf16.msra.mxu0 0
        %1172 = vmatprep.subr.bf16.mxu0 0
        %1173 = vmatpush1.bf16.msra.mxu0 0
        %1174 = vmatprep.subr.bf16.mxu0 0
        %1175 = vmatpush1.bf16.msra.mxu0 0
        %1176 = vmatprep.subr.bf16.mxu0 0
        %1177 = vmatpush1.bf16.msra.mxu0 0
        %1178 = vmatprep.subr.bf16.mxu0 0
        %1179 = vmatpush1.bf16.msra.mxu0 0
        %1180 = vmatprep.subr.bf16.mxu0 0
        %1181 = vmatpush1.bf16.msra.mxu0 0
        %1182 = vmatprep.subr.bf16.mxu0 0
        %1183 = vmatpush1.bf16.msra.mxu0 0
        %1184 = vmatprep.subr.bf16.mxu0 0
        %1185 = vmatpush1.bf16.msra.mxu0 0
        %1186 = vmatprep.subr.bf16.mxu0 0
        %1187 = vmatpush1.bf16.msra.mxu0 0
        %1188 = vmatprep.subr.bf16.mxu0 0
        %1189 = vmatpush1.bf16.msra.mxu0 0
        %1190 = vmatprep.subr.bf16.mxu0 0
        %1191 = vmatpush1.bf16.msra.mxu0 0
        %1192 = vmatprep.subr.bf16.mxu0 0
        %1193 = vmatpush1.bf16.msra.mxu0 0
        %1194 = vmatprep.subr.bf16.mxu0 0
        %1195 = vmatpush1.bf16.msra.mxu0 0
        %1196 = vmatprep.mubr.bf16.mxu0 0
        %1197 = vmatmul.mubr.bf16.gmra.mrb[0].mxu0 %v1036
        %v1198 = vpop.f32.mrb[0].mxu0
        %v1199 = vadd.f32 %v1150, %v1198
        %v1200 = vpop.f32.mrb[0].mxu0
        %v1201 = vpop.f32.mrb[0].mxu0
        %v1202 = vpop.f32.mrb[0].mxu0
        %1203 = vdwg.mxu0
        %1205 = vrot.lane.b32.xlu0 %v1073, 120
        %v1206 = vpop.permute.xlu0 %1205
        %1208 = vrot.lane.b32.xlu0 %v1073, 112
        %v1209 = vpop.permute.xlu0 %1208
        %1211 = vrot.lane.b32.xlu0 %v1073, 104
        %v1212 = vpop.permute.xlu0 %1211
        %v1214 = vcombine.low %v1073, %v1209
        %v1215 = vcombine.high %v1073, %v1209
        %v1217 = vunpack.c.l.s4 1983009808
        %v1218 = vunpack.c.0.s8 %v1217
        %v1219 = vlaneseq
        %v1220 = vshrl.u32 %v1219, 7
        %v1221 = vsub.s32 %v1218, %v1220
        %v1222 = vrot.slane %v1214, %v1221
        %v1224 = vunpack.c.l.s4 1983009808
        %v1225 = vunpack.c.0.s8 %v1224
        %v1226 = vlaneseq
        %v1227 = vshrl.u32 %v1226, 7
        %v1228 = vsub.s32 %v1225, %v1227
        %v1229 = vrot.slane %v1215, %v1228
        %v1230 = vcombine.low %v1206, %v1212
        %v1231 = vcombine.high %v1206, %v1212
        %v1233 = vunpack.c.l.s4 1983009808
        %v1234 = vunpack.c.0.s8 %v1233
        %v1235 = vlaneseq
        %v1236 = vshrl.u32 %v1235, 7
        %v1237 = vsub.s32 %v1234, %v1236
        %v1238 = vrot.slane %v1230, %v1237
        %v1240 = vunpack.c.l.s4 1983009808
        %v1241 = vunpack.c.0.s8 %v1240
        %v1242 = vlaneseq
        %v1243 = vshrl.u32 %v1242, 7
        %v1244 = vsub.s32 %v1241, %v1243
        %v1245 = vrot.slane %v1231, %v1244
        %v1246 = vcombine.low %v1222, %v1238
        %v1247 = vcombine.high %v1222, %v1238
        %v1249 = vunpack.c.l.s4 1934713408
        %v1250 = vunpack.c.0.s8 %v1249
        %v1251 = vlaneseq
        %v1252 = vshrl.u32 %v1251, 7
        %v1253 = vsub.s32 %v1250, %v1252
        %v1254 = vrot.slane %v1246, %v1253
        %v1256 = vunpack.c.l.s4 1934713408
        %v1257 = vunpack.c.0.s8 %v1256
        %v1258 = vlaneseq
        %v1259 = vshrl.u32 %v1258, 7
        %v1260 = vsub.s32 %v1257, %v1259
        %v1261 = vrot.slane %v1247, %v1260
        %v1262 = vcombine.low %v1229, %v1245
        %v1263 = vcombine.high %v1229, %v1245
        %v1265 = vunpack.c.l.s4 1934713408
        %v1266 = vunpack.c.0.s8 %v1265
        %v1267 = vlaneseq
        %v1268 = vshrl.u32 %v1267, 7
        %v1269 = vsub.s32 %v1266, %v1268
        %v1270 = vrot.slane %v1262, %v1269
        %v1272 = vunpack.c.l.s4 1934713408
        %v1273 = vunpack.c.0.s8 %v1272
        %v1274 = vlaneseq
        %v1275 = vshrl.u32 %v1274, 7
        %v1276 = vsub.s32 %v1273, %v1275
        %v1277 = vrot.slane %v1263, %v1276
        %v1278 = vcombine.high %v1254, 0.0
        %v1279 = vcombine.high %v1261, 0.0
        %v1280 = vcombine.high %v1270, 0.0
        %v1281 = vcombine.high %v1277, 0.0
        %v1282 = vcombine.low %v1254, %v1261
        %v1284 = vunpack.c.l.s4 1983009808
        %v1285 = vunpack.c.0.s8 %v1284
        %v1286 = vlaneseq
        %v1287 = vshrl.u32 %v1286, 7
        %v1288 = vsub.s32 %v1285, %v1287
        %v1289 = vrot.slane %v1282, %v1288
        %v1290 = vcombine.low %v1278, %v1279
        %v1292 = vunpack.c.l.s4 1983009808
        %v1293 = vunpack.c.0.s8 %v1292
        %v1294 = vlaneseq
        %v1295 = vshrl.u32 %v1294, 7
        %v1296 = vsub.s32 %v1293, %v1295
        %v1297 = vrot.slane %v1290, %v1296
        %v1298 = vcombine.low %v1270, %v1277
        %v1300 = vunpack.c.l.s4 1983009808
        %v1301 = vunpack.c.0.s8 %v1300
        %v1302 = vlaneseq
        %v1303 = vshrl.u32 %v1302, 7
        %v1304 = vsub.s32 %v1301, %v1303
        %v1305 = vrot.slane %v1298, %v1304
        %v1306 = vcombine.low %v1280, %v1281
        %v1308 = vunpack.c.l.s4 1983009808
        %v1309 = vunpack.c.0.s8 %v1308
        %v1310 = vlaneseq
        %v1311 = vshrl.u32 %v1310, 7
        %v1312 = vsub.s32 %v1309, %v1311
        %v1313 = vrot.slane %v1306, %v1312
        %v1314 = vcombine.low %v1289, %v1297
        %v1315 = vcombine.high %v1289, %v1297
        %v1317 = vunpack.c.l.s4 1934713408
        %v1318 = vunpack.c.0.s8 %v1317
        %v1319 = vlaneseq
        %v1320 = vshrl.u32 %v1319, 7
        %v1321 = vsub.s32 %v1318, %v1320
        %v1322 = vrot.slane %v1314, %v1321
        %v1324 = vunpack.c.l.s4 1934713408
        %v1325 = vunpack.c.0.s8 %v1324
        %v1326 = vlaneseq
        %v1327 = vshrl.u32 %v1326, 7
        %v1328 = vsub.s32 %v1325, %v1327
        %v1329 = vrot.slane %v1315, %v1328
        %v1330 = vcombine.low %v1305, %v1313
        %v1331 = vcombine.high %v1305, %v1313
        %v1333 = vunpack.c.l.s4 1934713408
        %v1334 = vunpack.c.0.s8 %v1333
        %v1335 = vlaneseq
        %v1336 = vshrl.u32 %v1335, 7
        %v1337 = vsub.s32 %v1334, %v1336
        %v1338 = vrot.slane %v1330, %v1337
        %v1340 = vunpack.c.l.s4 1934713408
        %v1341 = vunpack.c.0.s8 %v1340
        %v1342 = vlaneseq
        %v1343 = vshrl.u32 %v1342, 7
        %v1344 = vsub.s32 %v1341, %v1343
        %v1345 = vrot.slane %v1331, %v1344
        %v1346 = vcombine.low %v1322, %v1338
        %v1347 = vcombine.high %v1322, %v1338
        %v1348 = vcombine.low %v1329, %v1345
        %v1349 = vcombine.high %v1329, %v1345
        %v1350 = vpack.c.bf16 %v1346, %v1346
        %v1351 = vpack.c.bf16 %v1347, %v1347
        %v1352 = vpack.c.bf16 %v1348, %v1348
        %v1353 = vpack.c.bf16 %v1349, %v1349
        %1355 = vrot.lane.b32.xlu0 %v1136, 120
        %v1356 = vpop.permute.xlu0 %1355
        %1358 = vrot.lane.b32.xlu0 %v1136, 112
        %v1359 = vpop.permute.xlu0 %1358
        %1361 = vrot.lane.b32.xlu0 %v1136, 104
        %v1362 = vpop.permute.xlu0 %1361
        %v1364 = vcombine.low %v1136, %v1359
        %v1365 = vcombine.high %v1136, %v1359
        %v1367 = vunpack.c.l.s4 1983009808
        %v1368 = vunpack.c.0.s8 %v1367
        %v1369 = vlaneseq
        %v1370 = vshrl.u32 %v1369, 7
        %v1371 = vsub.s32 %v1368, %v1370
        %v1372 = vrot.slane %v1364, %v1371
        %v1374 = vunpack.c.l.s4 1983009808
        %v1375 = vunpack.c.0.s8 %v1374
        %v1376 = vlaneseq
        %v1377 = vshrl.u32 %v1376, 7
        %v1378 = vsub.s32 %v1375, %v1377
        %v1379 = vrot.slane %v1365, %v1378
        %v1380 = vcombine.low %v1356, %v1362
        %v1381 = vcombine.high %v1356, %v1362
        %v1383 = vunpack.c.l.s4 1983009808
        %v1384 = vunpack.c.0.s8 %v1383
        %v1385 = vlaneseq
        %v1386 = vshrl.u32 %v1385, 7
        %v1387 = vsub.s32 %v1384, %v1386
        %v1388 = vrot.slane %v1380, %v1387
        %v1390 = vunpack.c.l.s4 1983009808
        %v1391 = vunpack.c.0.s8 %v1390
        %v1392 = vlaneseq
        %v1393 = vshrl.u32 %v1392, 7
        %v1394 = vsub.s32 %v1391, %v1393
        %v1395 = vrot.slane %v1381, %v1394
        %v1396 = vcombine.low %v1372, %v1388
        %v1397 = vcombine.high %v1372, %v1388
        %v1399 = vunpack.c.l.s4 1934713408
        %v1400 = vunpack.c.0.s8 %v1399
        %v1401 = vlaneseq
        %v1402 = vshrl.u32 %v1401, 7
        %v1403 = vsub.s32 %v1400, %v1402
        %v1404 = vrot.slane %v1396, %v1403
        %v1406 = vunpack.c.l.s4 1934713408
        %v1407 = vunpack.c.0.s8 %v1406
        %v1408 = vlaneseq
        %v1409 = vshrl.u32 %v1408, 7
        %v1410 = vsub.s32 %v1407, %v1409
        %v1411 = vrot.slane %v1397, %v1410
        %v1412 = vcombine.low %v1379, %v1395
        %v1413 = vcombine.high %v1379, %v1395
        %v1415 = vunpack.c.l.s4 1934713408
        %v1416 = vunpack.c.0.s8 %v1415
        %v1417 = vlaneseq
        %v1418 = vshrl.u32 %v1417, 7
        %v1419 = vsub.s32 %v1416, %v1418
        %v1420 = vrot.slane %v1412, %v1419
        %v1422 = vunpack.c.l.s4 1934713408
        %v1423 = vunpack.c.0.s8 %v1422
        %v1424 = vlaneseq
        %v1425 = vshrl.u32 %v1424, 7
        %v1426 = vsub.s32 %v1423, %v1425
        %v1427 = vrot.slane %v1413, %v1426
        %v1428 = vcombine.high %v1404, 0.0
        %v1429 = vcombine.high %v1411, 0.0
        %v1430 = vcombine.high %v1420, 0.0
        %v1431 = vcombine.high %v1427, 0.0
        %v1432 = vcombine.low %v1404, %v1411
        %v1434 = vunpack.c.l.s4 1983009808
        %v1435 = vunpack.c.0.s8 %v1434
        %v1436 = vlaneseq
        %v1437 = vshrl.u32 %v1436, 7
        %v1438 = vsub.s32 %v1435, %v1437
        %v1439 = vrot.slane %v1432, %v1438
        %v1440 = vcombine.low %v1428, %v1429
        %v1442 = vunpack.c.l.s4 1983009808
        %v1443 = vunpack.c.0.s8 %v1442
        %v1444 = vlaneseq
        %v1445 = vshrl.u32 %v1444, 7
        %v1446 = vsub.s32 %v1443, %v1445
        %v1447 = vrot.slane %v1440, %v1446
        %v1448 = vcombine.low %v1420, %v1427
        %v1450 = vunpack.c.l.s4 1983009808
        %v1451 = vunpack.c.0.s8 %v1450
        %v1452 = vlaneseq
        %v1453 = vshrl.u32 %v1452, 7
        %v1454 = vsub.s32 %v1451, %v1453
        %v1455 = vrot.slane %v1448, %v1454
        %v1456 = vcombine.low %v1430, %v1431
        %v1458 = vunpack.c.l.s4 1983009808
        %v1459 = vunpack.c.0.s8 %v1458
        %v1460 = vlaneseq
        %v1461 = vshrl.u32 %v1460, 7
        %v1462 = vsub.s32 %v1459, %v1461
        %v1463 = vrot.slane %v1456, %v1462
        %v1464 = vcombine.low %v1439, %v1447
        %v1465 = vcombine.high %v1439, %v1447
        %v1467 = vunpack.c.l.s4 1934713408
        %v1468 = vunpack.c.0.s8 %v1467
        %v1469 = vlaneseq
        %v1470 = vshrl.u32 %v1469, 7
        %v1471 = vsub.s32 %v1468, %v1470
        %v1472 = vrot.slane %v1464, %v1471
        %v1474 = vunpack.c.l.s4 1934713408
        %v1475 = vunpack.c.0.s8 %v1474
        %v1476 = vlaneseq
        %v1477 = vshrl.u32 %v1476, 7
        %v1478 = vsub.s32 %v1475, %v1477
        %v1479 = vrot.slane %v1465, %v1478
        %v1480 = vcombine.low %v1455, %v1463
        %v1481 = vcombine.high %v1455, %v1463
        %v1483 = vunpack.c.l.s4 1934713408
        %v1484 = vunpack.c.0.s8 %v1483
        %v1485 = vlaneseq
        %v1486 = vshrl.u32 %v1485, 7
        %v1487 = vsub.s32 %v1484, %v1486
        %v1488 = vrot.slane %v1480, %v1487
        %v1490 = vunpack.c.l.s4 1934713408
        %v1491 = vunpack.c.0.s8 %v1490
        %v1492 = vlaneseq
        %v1493 = vshrl.u32 %v1492, 7
        %v1494 = vsub.s32 %v1491, %v1493
        %v1495 = vrot.slane %v1481, %v1494
        %v1496 = vcombine.low %v1472, %v1488
        %v1497 = vcombine.high %v1472, %v1488
        %v1498 = vcombine.low %v1479, %v1495
        %v1499 = vcombine.high %v1479, %v1495
        %v1500 = vpack.c.bf16 %v1496, %v1496
        %v1501 = vpack.c.bf16 %v1497, %v1497
        %v1502 = vpack.c.bf16 %v1498, %v1498
        %v1503 = vpack.c.bf16 %v1499, %v1499
        %1505 = vrot.lane.b32.xlu0 %v1199, 120
        %v1506 = vpop.permute.xlu0 %1505
        %1508 = vrot.lane.b32.xlu0 %v1199, 112
        %v1509 = vpop.permute.xlu0 %1508
        %1511 = vrot.lane.b32.xlu0 %v1199, 104
        %v1512 = vpop.permute.xlu0 %1511
        %v1514 = vcombine.low %v1199, %v1509
        %v1515 = vcombine.high %v1199, %v1509
        %v1517 = vunpack.c.l.s4 1983009808
        %v1518 = vunpack.c.0.s8 %v1517
        %v1519 = vlaneseq
        %v1520 = vshrl.u32 %v1519, 7
        %v1521 = vsub.s32 %v1518, %v1520
        %v1522 = vrot.slane %v1514, %v1521
        %v1524 = vunpack.c.l.s4 1983009808
        %v1525 = vunpack.c.0.s8 %v1524
        %v1526 = vlaneseq
        %v1527 = vshrl.u32 %v1526, 7
        %v1528 = vsub.s32 %v1525, %v1527
        %v1529 = vrot.slane %v1515, %v1528
        %v1530 = vcombine.low %v1506, %v1512
        %v1531 = vcombine.high %v1506, %v1512
        %v1533 = vunpack.c.l.s4 1983009808
        %v1534 = vunpack.c.0.s8 %v1533
        %v1535 = vlaneseq
        %v1536 = vshrl.u32 %v1535, 7
        %v1537 = vsub.s32 %v1534, %v1536
        %v1538 = vrot.slane %v1530, %v1537
        %v1540 = vunpack.c.l.s4 1983009808
        %v1541 = vunpack.c.0.s8 %v1540
        %v1542 = vlaneseq
        %v1543 = vshrl.u32 %v1542, 7
        %v1544 = vsub.s32 %v1541, %v1543
        %v1545 = vrot.slane %v1531, %v1544
        %v1546 = vcombine.low %v1522, %v1538
        %v1547 = vcombine.high %v1522, %v1538
        %v1549 = vunpack.c.l.s4 1934713408
        %v1550 = vunpack.c.0.s8 %v1549
        %v1551 = vlaneseq
        %v1552 = vshrl.u32 %v1551, 7
        %v1553 = vsub.s32 %v1550, %v1552
        %v1554 = vrot.slane %v1546, %v1553
        %v1556 = vunpack.c.l.s4 1934713408
        %v1557 = vunpack.c.0.s8 %v1556
        %v1558 = vlaneseq
        %v1559 = vshrl.u32 %v1558, 7
        %v1560 = vsub.s32 %v1557, %v1559
        %v1561 = vrot.slane %v1547, %v1560
        %v1562 = vcombine.low %v1529, %v1545
        %v1563 = vcombine.high %v1529, %v1545
        %v1565 = vunpack.c.l.s4 1934713408
        %v1566 = vunpack.c.0.s8 %v1565
        %v1567 = vlaneseq
        %v1568 = vshrl.u32 %v1567, 7
        %v1569 = vsub.s32 %v1566, %v1568
        %v1570 = vrot.slane %v1562, %v1569
        %v1572 = vunpack.c.l.s4 1934713408
        %v1573 = vunpack.c.0.s8 %v1572
        %v1574 = vlaneseq
        %v1575 = vshrl.u32 %v1574, 7
        %v1576 = vsub.s32 %v1573, %v1575
        %v1577 = vrot.slane %v1563, %v1576
        %v1578 = vcombine.high %v1554, 0.0
        %v1579 = vcombine.high %v1561, 0.0
        %v1580 = vcombine.high %v1570, 0.0
        %v1581 = vcombine.high %v1577, 0.0
        %v1582 = vcombine.low %v1554, %v1561
        %v1584 = vunpack.c.l.s4 1983009808
        %v1585 = vunpack.c.0.s8 %v1584
        %v1586 = vlaneseq
        %v1587 = vshrl.u32 %v1586, 7
        %v1588 = vsub.s32 %v1585, %v1587
        %v1589 = vrot.slane %v1582, %v1588
        %v1590 = vcombine.low %v1578, %v1579
        %v1592 = vunpack.c.l.s4 1983009808
        %v1593 = vunpack.c.0.s8 %v1592
        %v1594 = vlaneseq
        %v1595 = vshrl.u32 %v1594, 7
        %v1596 = vsub.s32 %v1593, %v1595
        %v1597 = vrot.slane %v1590, %v1596
        %v1598 = vcombine.low %v1570, %v1577
        %v1600 = vunpack.c.l.s4 1983009808
        %v1601 = vunpack.c.0.s8 %v1600
        %v1602 = vlaneseq
        %v1603 = vshrl.u32 %v1602, 7
        %v1604 = vsub.s32 %v1601, %v1603
        %v1605 = vrot.slane %v1598, %v1604
        %v1606 = vcombine.low %v1580, %v1581
        %v1608 = vunpack.c.l.s4 1983009808
        %v1609 = vunpack.c.0.s8 %v1608
        %v1610 = vlaneseq
        %v1611 = vshrl.u32 %v1610, 7
        %v1612 = vsub.s32 %v1609, %v1611
        %v1613 = vrot.slane %v1606, %v1612
        %v1614 = vcombine.low %v1589, %v1597
        %v1615 = vcombine.high %v1589, %v1597
        %v1617 = vunpack.c.l.s4 1934713408
        %v1618 = vunpack.c.0.s8 %v1617
        %v1619 = vlaneseq
        %v1620 = vshrl.u32 %v1619, 7
        %v1621 = vsub.s32 %v1618, %v1620
        %v1622 = vrot.slane %v1614, %v1621
        %v1624 = vunpack.c.l.s4 1934713408
        %v1625 = vunpack.c.0.s8 %v1624
        %v1626 = vlaneseq
        %v1627 = vshrl.u32 %v1626, 7
        %v1628 = vsub.s32 %v1625, %v1627
        %v1629 = vrot.slane %v1615, %v1628
        %v1630 = vcombine.low %v1605, %v1613
        %v1631 = vcombine.high %v1605, %v1613
        %v1633 = vunpack.c.l.s4 1934713408
        %v1634 = vunpack.c.0.s8 %v1633
        %v1635 = vlaneseq
        %v1636 = vshrl.u32 %v1635, 7
        %v1637 = vsub.s32 %v1634, %v1636
        %v1638 = vrot.slane %v1630, %v1637
        %v1640 = vunpack.c.l.s4 1934713408
        %v1641 = vunpack.c.0.s8 %v1640
        %v1642 = vlaneseq
        %v1643 = vshrl.u32 %v1642, 7
        %v1644 = vsub.s32 %v1641, %v1643
        %v1645 = vrot.slane %v1631, %v1644
        %v1646 = vcombine.low %v1622, %v1638
        %v1647 = vcombine.high %v1622, %v1638
        %v1648 = vcombine.low %v1629, %v1645
        %v1649 = vcombine.high %v1629, %v1645
        %v1650 = vpack.c.bf16 %v1646, %v1646
        %v1651 = vpack.c.bf16 %v1647, %v1647
        %v1652 = vpack.c.bf16 %v1648, %v1648
        %v1653 = vpack.c.bf16 %v1649, %v1649
        %vm1654 = vcmask 64512
        %v1656 = vsel %vm1654, %v1350, 0
        %v1659 = vsel %vm1654, %v1500, 0
        %1661 = vmatprep.subr.bf16.mxu0 0
        %1662 = vmatpush1.bf16.xpose.msra.mxu0 %v1659
        %1663 = vmatprep.subr.bf16.mxu0 0
        %1664 = vmatpush1.bf16.xpose.msra.mxu0 0
        %1665 = vmatprep.subr.bf16.mxu0 0
        %1666 = vmatpush1.bf16.xpose.msra.mxu0 0
        %1667 = vmatprep.subr.bf16.mxu0 0
        %1668 = vmatpush1.bf16.xpose.msra.mxu0 0
        %1669 = vmatprep.subr.bf16.mxu0 0
        %1670 = vmatpush1.bf16.xpose.msra.mxu0 0
        %1671 = vmatprep.subr.bf16.mxu0 0
        %1672 = vmatpush1.bf16.xpose.msra.mxu0 0
        %1673 = vmatprep.subr.bf16.mxu0 0
        %1674 = vmatpush1.bf16.xpose.msra.mxu0 0
        %1675 = vmatprep.subr.bf16.mxu0 0
        %1676 = vmatpush1.bf16.xpose.msra.mxu0 0
        %1677 = vmatprep.subr.bf16.mxu0 0
        %1678 = vmatpush1.bf16.xpose.msra.mxu0 0
        %1679 = vmatprep.subr.bf16.mxu0 0
        %1680 = vmatpush1.bf16.xpose.msra.mxu0 0
        %1681 = vmatprep.subr.bf16.mxu0 0
        %1682 = vmatpush1.bf16.xpose.msra.mxu0 0
        %1683 = vmatprep.subr.bf16.mxu0 0
        %1684 = vmatpush1.bf16.xpose.msra.mxu0 0
        %1685 = vmatprep.subr.bf16.mxu0 0
        %1686 = vmatpush1.bf16.xpose.msra.mxu0 0
        %1687 = vmatprep.subr.bf16.mxu0 0
        %1688 = vmatpush1.bf16.xpose.msra.mxu0 0
        %1689 = vmatprep.subr.bf16.mxu0 0
        %1690 = vmatpush1.bf16.xpose.msra.mxu0 0
        %1691 = vmatprep.subr.bf16.mxu0 0
        %1692 = vmatpush1.bf16.xpose.msra.mxu0 0
        %1693 = vmatprep.mubr.bf16.mxu0 0
        %1694 = vmatmul.mubr.bf16.gmra.mrb[0].mxu0 %v1656
        %v1695 = vpop.f32.mrb[0].mxu0
        %v1696 = vadd.f32 0.0, %v1695
        %v1697 = vpop.f32.mrb[0].mxu0
        %v1698 = vpop.f32.mrb[0].mxu0
        %v1699 = vpop.f32.mrb[0].mxu0
        %1700 = vdwg.mxu0
        %v1702 = vsel %vm1654, %v1351, 0
        %v1705 = vsel %vm1654, %v1501, 0
        %1707 = vmatprep.subr.bf16.mxu0 0
        %1708 = vmatpush1.bf16.xpose.msra.mxu0 %v1705
        %1709 = vmatprep.subr.bf16.mxu0 0
        %1710 = vmatpush1.bf16.xpose.msra.mxu0 0
        %1711 = vmatprep.subr.bf16.mxu0 0
        %1712 = vmatpush1.bf16.xpose.msra.mxu0 0
        %1713 = vmatprep.subr.bf16.mxu0 0
        %1714 = vmatpush1.bf16.xpose.msra.mxu0 0
        %1715 = vmatprep.subr.bf16.mxu0 0
        %1716 = vmatpush1.bf16.xpose.msra.mxu0 0
        %1717 = vmatprep.subr.bf16.mxu0 0
        %1718 = vmatpush1.bf16.xpose.msra.mxu0 0
        %1719 = vmatprep.subr.bf16.mxu0 0
        %1720 = vmatpush1.bf16.xpose.msra.mxu0 0
        %1721 = vmatprep.subr.bf16.mxu0 0
        %1722 = vmatpush1.bf16.xpose.msra.mxu0 0
        %1723 = vmatprep.subr.bf16.mxu0 0
        %1724 = vmatpush1.bf16.xpose.msra.mxu0 0
        %1725 = vmatprep.subr.bf16.mxu0 0
        %1726 = vmatpush1.bf16.xpose.msra.mxu0 0
        %1727 = vmatprep.subr.bf16.mxu0 0
        %1728 = vmatpush1.bf16.xpose.msra.mxu0 0
        %1729 = vmatprep.subr.bf16.mxu0 0
        %1730 = vmatpush1.bf16.xpose.msra.mxu0 0
        %1731 = vmatprep.subr.bf16.mxu0 0
        %1732 = vmatpush1.bf16.xpose.msra.mxu0 0
        %1733 = vmatprep.subr.bf16.mxu0 0
        %1734 = vmatpush1.bf16.xpose.msra.mxu0 0
        %1735 = vmatprep.subr.bf16.mxu0 0
        %1736 = vmatpush1.bf16.xpose.msra.mxu0 0
        %1737 = vmatprep.subr.bf16.mxu0 0
        %1738 = vmatpush1.bf16.xpose.msra.mxu0 0
        %1739 = vmatprep.mubr.bf16.mxu0 0
        %1740 = vmatmul.mubr.bf16.gmra.mrb[0].mxu0 %v1702
        %v1741 = vpop.f32.mrb[0].mxu0
        %v1742 = vadd.f32 0.0, %v1741
        %v1743 = vpop.f32.mrb[0].mxu0
        %v1744 = vpop.f32.mrb[0].mxu0
        %v1745 = vpop.f32.mrb[0].mxu0
        %1746 = vdwg.mxu0
        %v1748 = vsel %vm1654, %v1352, 0
        %v1751 = vsel %vm1654, %v1502, 0
        %1753 = vmatprep.subr.bf16.mxu0 0
        %1754 = vmatpush1.bf16.xpose.msra.mxu0 %v1751
        %1755 = vmatprep.subr.bf16.mxu0 0
        %1756 = vmatpush1.bf16.xpose.msra.mxu0 0
        %1757 = vmatprep.subr.bf16.mxu0 0
        %1758 = vmatpush1.bf16.xpose.msra.mxu0 0
        %1759 = vmatprep.subr.bf16.mxu0 0
        %1760 = vmatpush1.bf16.xpose.msra.mxu0 0
        %1761 = vmatprep.subr.bf16.mxu0 0
        %1762 = vmatpush1.bf16.xpose.msra.mxu0 0
        %1763 = vmatprep.subr.bf16.mxu0 0
        %1764 = vmatpush1.bf16.xpose.msra.mxu0 0
        %1765 = vmatprep.subr.bf16.mxu0 0
        %1766 = vmatpush1.bf16.xpose.msra.mxu0 0
        %1767 = vmatprep.subr.bf16.mxu0 0
        %1768 = vmatpush1.bf16.xpose.msra.mxu0 0
        %1769 = vmatprep.subr.bf16.mxu0 0
        %1770 = vmatpush1.bf16.xpose.msra.mxu0 0
        %1771 = vmatprep.subr.bf16.mxu0 0
        %1772 = vmatpush1.bf16.xpose.msra.mxu0 0
        %1773 = vmatprep.subr.bf16.mxu0 0
        %1774 = vmatpush1.bf16.xpose.msra.mxu0 0
        %1775 = vmatprep.subr.bf16.mxu0 0
        %1776 = vmatpush1.bf16.xpose.msra.mxu0 0
        %1777 = vmatprep.subr.bf16.mxu0 0
        %1778 = vmatpush1.bf16.xpose.msra.mxu0 0
        %1779 = vmatprep.subr.bf16.mxu0 0
        %1780 = vmatpush1.bf16.xpose.msra.mxu0 0
        %1781 = vmatprep.subr.bf16.mxu0 0
        %1782 = vmatpush1.bf16.xpose.msra.mxu0 0
        %1783 = vmatprep.subr.bf16.mxu0 0
        %1784 = vmatpush1.bf16.xpose.msra.mxu0 0
        %1785 = vmatprep.mubr.bf16.mxu0 0
        %1786 = vmatmul.mubr.bf16.gmra.mrb[0].mxu0 %v1748
        %v1787 = vpop.f32.mrb[0].mxu0
        %v1788 = vadd.f32 0.0, %v1787
        %v1789 = vpop.f32.mrb[0].mxu0
        %v1790 = vpop.f32.mrb[0].mxu0
        %v1791 = vpop.f32.mrb[0].mxu0
        %1792 = vdwg.mxu0
        %v1794 = vsel %vm1654, %v1353, 0
        %v1797 = vsel %vm1654, %v1503, 0
        %1799 = vmatprep.subr.bf16.mxu0 0
        %1800 = vmatpush1.bf16.xpose.msra.mxu0 %v1797
        %1801 = vmatprep.subr.bf16.mxu0 0
        %1802 = vmatpush1.bf16.xpose.msra.mxu0 0
        %1803 = vmatprep.subr.bf16.mxu0 0
        %1804 = vmatpush1.bf16.xpose.msra.mxu0 0
        %1805 = vmatprep.subr.bf16.mxu0 0
        %1806 = vmatpush1.bf16.xpose.msra.mxu0 0
        %1807 = vmatprep.subr.bf16.mxu0 0
        %1808 = vmatpush1.bf16.xpose.msra.mxu0 0
        %1809 = vmatprep.subr.bf16.mxu0 0
        %1810 = vmatpush1.bf16.xpose.msra.mxu0 0
        %1811 = vmatprep.subr.bf16.mxu0 0
        %1812 = vmatpush1.bf16.xpose.msra.mxu0 0
        %1813 = vmatprep.subr.bf16.mxu0 0
        %1814 = vmatpush1.bf16.xpose.msra.mxu0 0
        %1815 = vmatprep.subr.bf16.mxu0 0
        %1816 = vmatpush1.bf16.xpose.msra.mxu0 0
        %1817 = vmatprep.subr.bf16.mxu0 0
        %1818 = vmatpush1.bf16.xpose.msra.mxu0 0
        %1819 = vmatprep.subr.bf16.mxu0 0
        %1820 = vmatpush1.bf16.xpose.msra.mxu0 0
        %1821 = vmatprep.subr.bf16.mxu0 0
        %1822 = vmatpush1.bf16.xpose.msra.mxu0 0
        %1823 = vmatprep.subr.bf16.mxu0 0
        %1824 = vmatpush1.bf16.xpose.msra.mxu0 0
        %1825 = vmatprep.subr.bf16.mxu0 0
        %1826 = vmatpush1.bf16.xpose.msra.mxu0 0
        %1827 = vmatprep.subr.bf16.mxu0 0
        %1828 = vmatpush1.bf16.xpose.msra.mxu0 0
        %1829 = vmatprep.subr.bf16.mxu0 0
        %1830 = vmatpush1.bf16.xpose.msra.mxu0 0
        %1831 = vmatprep.mubr.bf16.mxu0 0
        %1832 = vmatmul.mubr.bf16.gmra.mrb[0].mxu0 %v1794
        %v1833 = vpop.f32.mrb[0].mxu0
        %v1834 = vadd.f32 0.0, %v1833
        %v1835 = vpop.f32.mrb[0].mxu0
        %v1836 = vpop.f32.mrb[0].mxu0
        %v1837 = vpop.f32.mrb[0].mxu0
        %1838 = vdwg.mxu0
        %v1839 = vmul.f32 %v1696, 0.35355338
        %v1840 = vmul.f32 %v1742, 0.35355338
        %v1841 = vmul.f32 %v1788, 0.35355338
        %v1842 = vmul.f32 %v1834, 0.35355338
        %v1844 = vlaneseq
        %v1845 = vshrl.u32 %v1844, 7
        %v1846 = vsub.s32 0, %v1845
        %v1847 = vrot.slane %v979, %v1846
        %v1849 = vadd.f32 %v1839, %v1847
        %v1850 = vadd.f32 %v1840, %v1847
        %v1851 = vadd.f32 %v1841, %v1847
        %v1852 = vadd.f32 %v1842, %v1847
        %v1853 = vsel %vm1654, %v1849, -inf
        %1854 = vmax.xlane.f32.xlu0 %v1853
        %v1855 = vpop.xlane.xlu0 %1854
        %v1856 = vsel %vm1654, %v1850, -inf
        %1857 = vmax.xlane.f32.xlu0 %v1856
        %v1858 = vpop.xlane.xlu0 %1857
        %v1859 = vsel %vm1654, %v1851, -inf
        %1860 = vmax.xlane.f32.xlu0 %v1859
        %v1861 = vpop.xlane.xlu0 %1860
        %v1862 = vsel %vm1654, %v1852, -inf
        %1863 = vmax.xlane.f32.xlu0 %v1862
        %v1864 = vpop.xlane.xlu0 %1863
        %v1865 = vsub.f32 %v1849, %v1855
        %v1866 = vsub.f32 %v1850, %v1858
        %v1867 = vsub.f32 %v1851, %v1861
        %v1868 = vsub.f32 %v1852, %v1864
        %v1869 = vmul.f32 %v1865, 1.442695
        %v1870 = vpow.pop %v1869
        %v1871 = vmul.f32 %v1866, 1.442695
        %v1872 = vpow.pop %v1871
        %v1873 = vmul.f32 %v1867, 1.442695
        %v1874 = vpow.pop %v1873
        %v1875 = vmul.f32 %v1868, 1.442695
        %v1876 = vpow.pop %v1875
        %v1877 = vsel %vm1654, %v1870, 0.0
        %1878 = vadd.xlane.f32.xlu0 %v1877
        %v1879 = vpop.xlane.xlu0 %1878
        %v1880 = vsel %vm1654, %v1872, 0.0
        %1881 = vadd.xlane.f32.xlu0 %v1880
        %v1882 = vpop.xlane.xlu0 %1881
        %v1883 = vsel %vm1654, %v1874, 0.0
        %1884 = vadd.xlane.f32.xlu0 %v1883
        %v1885 = vpop.xlane.xlu0 %1884
        %v1886 = vsel %vm1654, %v1876, 0.0
        %1887 = vadd.xlane.f32.xlu0 %v1886
        %v1888 = vpop.xlane.xlu0 %1887
        %v1889 = vrcp.pop %v1879
        %v1890 = vrcp.pop %v1882
        %v1891 = vrcp.pop %v1885
        %v1892 = vrcp.pop %v1888
        %v1893 = vmul.f32 %v1870, %v1889
        %v1894 = vmul.f32 %v1872, %v1890
        %v1895 = vmul.f32 %v1874, %v1891
        %v1896 = vmul.f32 %v1876, %v1892
        %v1897 = vpack.c.bf16 %v1893, %v1893
        %v1898 = vpack.c.bf16 %v1894, %v1894
        %v1899 = vpack.c.bf16 %v1895, %v1895
        %v1900 = vpack.c.bf16 %v1896, %v1896
        %v1902 = vsel %vm1654, %v1897, 0
        %vm1904 = vcmask 1043456
        %v1906 = vsel %vm1904, %v1650, 0
        %1908 = vmatprep.subr.bf16.mxu0 0
        %1909 = vmatpush1.bf16.msra.mxu0 %v1906
        %1910 = vmatprep.subr.bf16.mxu0 0
        %1911 = vmatpush1.bf16.msra.mxu0 0
        %1912 = vmatprep.subr.bf16.mxu0 0
        %1913 = vmatpush1.bf16.msra.mxu0 0
        %1914 = vmatprep.subr.bf16.mxu0 0
        %1915 = vmatpush1.bf16.msra.mxu0 0
        %1916 = vmatprep.subr.bf16.mxu0 0
        %1917 = vmatpush1.bf16.msra.mxu0 0
        %1918 = vmatprep.subr.bf16.mxu0 0
        %1919 = vmatpush1.bf16.msra.mxu0 0
        %1920 = vmatprep.subr.bf16.mxu0 0
        %1921 = vmatpush1.bf16.msra.mxu0 0
        %1922 = vmatprep.subr.bf16.mxu0 0
        %1923 = vmatpush1.bf16.msra.mxu0 0
        %1924 = vmatprep.subr.bf16.mxu0 0
        %1925 = vmatpush1.bf16.msra.mxu0 0
        %1926 = vmatprep.subr.bf16.mxu0 0
        %1927 = vmatpush1.bf16.msra.mxu0 0
        %1928 = vmatprep.subr.bf16.mxu0 0
        %1929 = vmatpush1.bf16.msra.mxu0 0
        %1930 = vmatprep.subr.bf16.mxu0 0
        %1931 = vmatpush1.bf16.msra.mxu0 0
        %1932 = vmatprep.subr.bf16.mxu0 0
        %1933 = vmatpush1.bf16.msra.mxu0 0
        %1934 = vmatprep.subr.bf16.mxu0 0
        %1935 = vmatpush1.bf16.msra.mxu0 0
        %1936 = vmatprep.subr.bf16.mxu0 0
        %1937 = vmatpush1.bf16.msra.mxu0 0
        %1938 = vmatprep.subr.bf16.mxu0 0
        %1939 = vmatpush1.bf16.msra.mxu0 0
        %1940 = vmatprep.mubr.bf16.mxu0 0
        %1941 = vmatmul.mubr.bf16.gmra.mrb[0].mxu0 %v1902
        %v1942 = vpop.f32.mrb[0].mxu0
        %v1943 = vadd.f32 0.0, %v1942
        %v1944 = vpop.f32.mrb[0].mxu0
        %v1945 = vpop.f32.mrb[0].mxu0
        %v1946 = vpop.f32.mrb[0].mxu0
        %1947 = vdwg.mxu0
        %v1949 = vsel %vm1654, %v1898, 0
        %v1952 = vsel %vm1904, %v1651, 0
        %1954 = vmatprep.subr.bf16.mxu0 0
        %1955 = vmatpush1.bf16.msra.mxu0 %v1952
        %1956 = vmatprep.subr.bf16.mxu0 0
        %1957 = vmatpush1.bf16.msra.mxu0 0
        %1958 = vmatprep.subr.bf16.mxu0 0
        %1959 = vmatpush1.bf16.msra.mxu0 0
        %1960 = vmatprep.subr.bf16.mxu0 0
        %1961 = vmatpush1.bf16.msra.mxu0 0
        %1962 = vmatprep.subr.bf16.mxu0 0
        %1963 = vmatpush1.bf16.msra.mxu0 0
        %1964 = vmatprep.subr.bf16.mxu0 0
        %1965 = vmatpush1.bf16.msra.mxu0 0
        %1966 = vmatprep.subr.bf16.mxu0 0
        %1967 = vmatpush1.bf16.msra.mxu0 0
        %1968 = vmatprep.subr.bf16.mxu0 0
        %1969 = vmatpush1.bf16.msra.mxu0 0
        %1970 = vmatprep.subr.bf16.mxu0 0
        %1971 = vmatpush1.bf16.msra.mxu0 0
        %1972 = vmatprep.subr.bf16.mxu0 0
        %1973 = vmatpush1.bf16.msra.mxu0 0
        %1974 = vmatprep.subr.bf16.mxu0 0
        %1975 = vmatpush1.bf16.msra.mxu0 0
        %1976 = vmatprep.subr.bf16.mxu0 0
        %1977 = vmatpush1.bf16.msra.mxu0 0
        %1978 = vmatprep.subr.bf16.mxu0 0
        %1979 = vmatpush1.bf16.msra.mxu0 0
        %1980 = vmatprep.subr.bf16.mxu0 0
        %1981 = vmatpush1.bf16.msra.mxu0 0
        %1982 = vmatprep.subr.bf16.mxu0 0
        %1983 = vmatpush1.bf16.msra.mxu0 0
        %1984 = vmatprep.subr.bf16.mxu0 0
        %1985 = vmatpush1.bf16.msra.mxu0 0
        %1986 = vmatprep.mubr.bf16.mxu0 0
        %1987 = vmatmul.mubr.bf16.gmra.mrb[0].mxu0 %v1949
        %v1988 = vpop.f32.mrb[0].mxu0
        %v1989 = vadd.f32 0.0, %v1988
        %v1990 = vpop.f32.mrb[0].mxu0
        %v1991 = vpop.f32.mrb[0].mxu0
        %v1992 = vpop.f32.mrb[0].mxu0
        %1993 = vdwg.mxu0
        %v1995 = vsel %vm1654, %v1899, 0
        %v1998 = vsel %vm1904, %v1652, 0
        %2000 = vmatprep.subr.bf16.mxu0 0
        %2001 = vmatpush1.bf16.msra.mxu0 %v1998
        %2002 = vmatprep.subr.bf16.mxu0 0
        %2003 = vmatpush1.bf16.msra.mxu0 0
        %2004 = vmatprep.subr.bf16.mxu0 0
        %2005 = vmatpush1.bf16.msra.mxu0 0
        %2006 = vmatprep.subr.bf16.mxu0 0
        %2007 = vmatpush1.bf16.msra.mxu0 0
        %2008 = vmatprep.subr.bf16.mxu0 0
        %2009 = vmatpush1.bf16.msra.mxu0 0
        %2010 = vmatprep.subr.bf16.mxu0 0
        %2011 = vmatpush1.bf16.msra.mxu0 0
        %2012 = vmatprep.subr.bf16.mxu0 0
        %2013 = vmatpush1.bf16.msra.mxu0 0
        %2014 = vmatprep.subr.bf16.mxu0 0
        %2015 = vmatpush1.bf16.msra.mxu0 0
        %2016 = vmatprep.subr.bf16.mxu0 0
        %2017 = vmatpush1.bf16.msra.mxu0 0
        %2018 = vmatprep.subr.bf16.mxu0 0
        %2019 = vmatpush1.bf16.msra.mxu0 0
        %2020 = vmatprep.subr.bf16.mxu0 0
        %2021 = vmatpush1.bf16.msra.mxu0 0
        %2022 = vmatprep.subr.bf16.mxu0 0
        %2023 = vmatpush1.bf16.msra.mxu0 0
        %2024 = vmatprep.subr.bf16.mxu0 0
        %2025 = vmatpush1.bf16.msra.mxu0 0
        %2026 = vmatprep.subr.bf16.mxu0 0
        %2027 = vmatpush1.bf16.msra.mxu0 0
        %2028 = vmatprep.subr.bf16.mxu0 0
        %2029 = vmatpush1.bf16.msra.mxu0 0
        %2030 = vmatprep.subr.bf16.mxu0 0
        %2031 = vmatpush1.bf16.msra.mxu0 0
        %2032 = vmatprep.mubr.bf16.mxu0 0
        %2033 = vmatmul.mubr.bf16.gmra.mrb[0].mxu0 %v1995
        %v2034 = vpop.f32.mrb[0].mxu0
        %v2035 = vadd.f32 0.0, %v2034
        %v2036 = vpop.f32.mrb[0].mxu0
        %v2037 = vpop.f32.mrb[0].mxu0
        %v2038 = vpop.f32.mrb[0].mxu0
        %2039 = vdwg.mxu0
        %v2041 = vsel %vm1654, %v1900, 0
        %v2044 = vsel %vm1904, %v1653, 0
        %2046 = vmatprep.subr.bf16.mxu0 0
        %2047 = vmatpush1.bf16.msra.mxu0 %v2044
        %2048 = vmatprep.subr.bf16.mxu0 0
        %2049 = vmatpush1.bf16.msra.mxu0 0
        %2050 = vmatprep.subr.bf16.mxu0 0
        %2051 = vmatpush1.bf16.msra.mxu0 0
        %2052 = vmatprep.subr.bf16.mxu0 0
        %2053 = vmatpush1.bf16.msra.mxu0 0
        %2054 = vmatprep.subr.bf16.mxu0 0
        %2055 = vmatpush1.bf16.msra.mxu0 0
        %2056 = vmatprep.subr.bf16.mxu0 0
        %2057 = vmatpush1.bf16.msra.mxu0 0
        %2058 = vmatprep.subr.bf16.mxu0 0
        %2059 = vmatpush1.bf16.msra.mxu0 0
        %2060 = vmatprep.subr.bf16.mxu0 0
        %2061 = vmatpush1.bf16.msra.mxu0 0
        %2062 = vmatprep.subr.bf16.mxu0 0
        %2063 = vmatpush1.bf16.msra.mxu0 0
        %2064 = vmatprep.subr.bf16.mxu0 0
        %2065 = vmatpush1.bf16.msra.mxu0 0
        %2066 = vmatprep.subr.bf16.mxu0 0
        %2067 = vmatpush1.bf16.msra.mxu0 0
        %2068 = vmatprep.subr.bf16.mxu0 0
        %2069 = vmatpush1.bf16.msra.mxu0 0
        %2070 = vmatprep.subr.bf16.mxu0 0
        %2071 = vmatpush1.bf16.msra.mxu0 0
        %2072 = vmatprep.subr.bf16.mxu0 0
        %2073 = vmatpush1.bf16.msra.mxu0 0
        %2074 = vmatprep.subr.bf16.mxu0 0
        %2075 = vmatpush1.bf16.msra.mxu0 0
        %2076 = vmatprep.subr.bf16.mxu0 0
        %2077 = vmatpush1.bf16.msra.mxu0 0
        %2078 = vmatprep.mubr.bf16.mxu0 0
        %2079 = vmatmul.mubr.bf16.gmra.mrb[0].mxu0 %v2041
        %v2080 = vpop.f32.mrb[0].mxu0
        %v2081 = vadd.f32 0.0, %v2080
        %v2082 = vpop.f32.mrb[0].mxu0
        %v2083 = vpop.f32.mrb[0].mxu0
        %v2084 = vpop.f32.mrb[0].mxu0
        %2085 = vdwg.mxu0
        %v2086 = vcombine.low %v1943, %v2035
        %v2087 = vcombine.high %v1943, %v2035
        %v2089 = vunpack.c.l.s4 1983009808
        %v2090 = vunpack.c.0.s8 %v2089
        %v2091 = vlaneseq
        %v2092 = vshrl.u32 %v2091, 7
        %v2093 = vsub.s32 %v2090, %v2092
        %v2094 = vrot.slane %v2086, %v2093
        %v2096 = vunpack.c.l.s4 1983009808
        %v2097 = vunpack.c.0.s8 %v2096
        %v2098 = vlaneseq
        %v2099 = vshrl.u32 %v2098, 7
        %v2100 = vsub.s32 %v2097, %v2099
        %v2101 = vrot.slane %v2087, %v2100
        %v2102 = vcombine.low %v1989, %v2081
        %v2103 = vcombine.high %v1989, %v2081
        %v2105 = vunpack.c.l.s4 1983009808
        %v2106 = vunpack.c.0.s8 %v2105
        %v2107 = vlaneseq
        %v2108 = vshrl.u32 %v2107, 7
        %v2109 = vsub.s32 %v2106, %v2108
        %v2110 = vrot.slane %v2102, %v2109
        %v2112 = vunpack.c.l.s4 1983009808
        %v2113 = vunpack.c.0.s8 %v2112
        %v2114 = vlaneseq
        %v2115 = vshrl.u32 %v2114, 7
        %v2116 = vsub.s32 %v2113, %v2115
        %v2117 = vrot.slane %v2103, %v2116
        %v2118 = vcombine.low %v2094, %v2110
        %v2119 = vcombine.high %v2094, %v2110
        %v2121 = vunpack.c.l.s4 1934713408
        %v2122 = vunpack.c.0.s8 %v2121
        %v2123 = vlaneseq
        %v2124 = vshrl.u32 %v2123, 7
        %v2125 = vsub.s32 %v2122, %v2124
        %v2126 = vrot.slane %v2118, %v2125
        %v2128 = vunpack.c.l.s4 1934713408
        %v2129 = vunpack.c.0.s8 %v2128
        %v2130 = vlaneseq
        %v2131 = vshrl.u32 %v2130, 7
        %v2132 = vsub.s32 %v2129, %v2131
        %v2133 = vrot.slane %v2119, %v2132
        %v2134 = vcombine.low %v2101, %v2117
        %v2135 = vcombine.high %v2101, %v2117
        %v2137 = vunpack.c.l.s4 1934713408
        %v2138 = vunpack.c.0.s8 %v2137
        %v2139 = vlaneseq
        %v2140 = vshrl.u32 %v2139, 7
        %v2141 = vsub.s32 %v2138, %v2140
        %v2142 = vrot.slane %v2134, %v2141
        %v2144 = vunpack.c.l.s4 1934713408
        %v2145 = vunpack.c.0.s8 %v2144
        %v2146 = vlaneseq
        %v2147 = vshrl.u32 %v2146, 7
        %v2148 = vsub.s32 %v2145, %v2147
        %v2149 = vrot.slane %v2135, %v2148
        %v2150 = vcombine.high %v2126, 0.0
        %v2151 = vcombine.high %v2133, 0.0
        %v2152 = vcombine.high %v2142, 0.0
        %v2153 = vcombine.high %v2149, 0.0
        %v2154 = vcombine.low %v2126, %v2133
        %v2156 = vunpack.c.l.s4 1983009808
        %v2157 = vunpack.c.0.s8 %v2156
        %v2158 = vlaneseq
        %v2159 = vshrl.u32 %v2158, 7
        %v2160 = vsub.s32 %v2157, %v2159
        %v2161 = vrot.slane %v2154, %v2160
        %v2162 = vcombine.low %v2150, %v2151
        %v2164 = vunpack.c.l.s4 1983009808
        %v2165 = vunpack.c.0.s8 %v2164
        %v2166 = vlaneseq
        %v2167 = vshrl.u32 %v2166, 7
        %v2168 = vsub.s32 %v2165, %v2167
        %v2169 = vrot.slane %v2162, %v2168
        %v2170 = vcombine.low %v2142, %v2149
        %v2172 = vunpack.c.l.s4 1983009808
        %v2173 = vunpack.c.0.s8 %v2172
        %v2174 = vlaneseq
        %v2175 = vshrl.u32 %v2174, 7
        %v2176 = vsub.s32 %v2173, %v2175
        %v2177 = vrot.slane %v2170, %v2176
        %v2178 = vcombine.low %v2152, %v2153
        %v2180 = vunpack.c.l.s4 1983009808
        %v2181 = vunpack.c.0.s8 %v2180
        %v2182 = vlaneseq
        %v2183 = vshrl.u32 %v2182, 7
        %v2184 = vsub.s32 %v2181, %v2183
        %v2185 = vrot.slane %v2178, %v2184
        %v2186 = vcombine.low %v2161, %v2169
        %v2187 = vcombine.high %v2161, %v2169
        %v2189 = vunpack.c.l.s4 1934713408
        %v2190 = vunpack.c.0.s8 %v2189
        %v2191 = vlaneseq
        %v2192 = vshrl.u32 %v2191, 7
        %v2193 = vsub.s32 %v2190, %v2192
        %v2194 = vrot.slane %v2186, %v2193
        %v2196 = vunpack.c.l.s4 1934713408
        %v2197 = vunpack.c.0.s8 %v2196
        %v2198 = vlaneseq
        %v2199 = vshrl.u32 %v2198, 7
        %v2200 = vsub.s32 %v2197, %v2199
        %v2201 = vrot.slane %v2187, %v2200
        %v2202 = vcombine.low %v2177, %v2185
        %v2203 = vcombine.high %v2177, %v2185
        %v2205 = vunpack.c.l.s4 1934713408
        %v2206 = vunpack.c.0.s8 %v2205
        %v2207 = vlaneseq
        %v2208 = vshrl.u32 %v2207, 7
        %v2209 = vsub.s32 %v2206, %v2208
        %v2210 = vrot.slane %v2202, %v2209
        %v2212 = vunpack.c.l.s4 1934713408
        %v2213 = vunpack.c.0.s8 %v2212
        %v2214 = vlaneseq
        %v2215 = vshrl.u32 %v2214, 7
        %v2216 = vsub.s32 %v2213, %v2215
        %v2217 = vrot.slane %v2203, %v2216
        %v2218 = vcombine.low %v2194, %v2210
        %v2219 = vcombine.high %v2194, %v2210
        %v2220 = vcombine.low %v2201, %v2217
        %v2221 = vcombine.high %v2201, %v2217
        %2223 = vrot.lane.b32.xlu0 %v2219, 8
        %v2224 = vpop.permute.xlu0 %2223
        %2227 = vrot.lane.b32.xlu0 %v2220, 16
        %v2228 = vpop.permute.xlu0 %2227
        %2231 = vrot.lane.b32.xlu0 %v2221, 24
        %v2232 = vpop.permute.xlu0 %2231
        %v2234 = vsel %vm1654, %v2218, %v2224
        %vm2235 = vcmask 130048
        %v2236 = vsel %vm2235, %v2234, %v2228
        %vm2237 = vcmask 195584
        %v2238 = vsel %vm2237, %v2236, %v2232
        %v2239 = vpack.c.bf16 %v2238, %v2238
        %v2240 = vld [vmem:[%s786] sm:$0xf]
        %v2241 = vld [vmem:[%s786 + $0x4] sm:$0xf]
        %v2242 = vld [vmem:[%s786 + $0x8] sm:$0xf]
        %v2243 = vld [vmem:[%s786 + $0xc] sm:$0xf]
        %v2244 = vld [vmem:[%s950] sm:$0x1]
        %v2246 = vlaneseq
        %v2247 = vshrl.u32 %v2246, 7
        %v2248 = vsub.s32 0, %v2247
        %v2249 = vrot.slane %v2244, %v2248
        %v2255 = vunpack.c.l.b16 %v2240
        %v2256 = vunpack.c.l.b16 %v2241
        %v2257 = vunpack.c.l.b16 %v2242
        %v2258 = vunpack.c.l.b16 %v2243
        %v2259 = vpack.c.b16 %v2256, %v2255
        %v2260 = vpack.c.b16 %v2258, %v2257
        %v2264 = vsel %vm982, %v2239, 0
        %2266 = vmatprep.subr.bf16.mxu0 0
        %2267 = vmatpush1.bf16.msra.mxu0 %v2259
        %2268 = vmatprep.subr.bf16.mxu0 0
        %2269 = vmatpush1.bf16.msra.mxu0 %v2260
        %2270 = vmatprep.subr.bf16.mxu0 0
        %2271 = vmatpush1.bf16.msra.mxu0 0
        %2272 = vmatprep.subr.bf16.mxu0 0
        %2273 = vmatpush1.bf16.msra.mxu0 0
        %2274 = vmatprep.subr.bf16.mxu0 0
        %2275 = vmatpush1.bf16.msra.mxu0 0
        %2276 = vmatprep.subr.bf16.mxu0 0
        %2277 = vmatpush1.bf16.msra.mxu0 0
        %2278 = vmatprep.subr.bf16.mxu0 0
        %2279 = vmatpush1.bf16.msra.mxu0 0
        %2280 = vmatprep.subr.bf16.mxu0 0
        %2281 = vmatpush1.bf16.msra.mxu0 0
        %2282 = vmatprep.subr.bf16.mxu0 0
        %2283 = vmatpush1.bf16.msra.mxu0 0
        %2284 = vmatprep.subr.bf16.mxu0 0
        %2285 = vmatpush1.bf16.msra.mxu0 0
        %2286 = vmatprep.subr.bf16.mxu0 0
        %2287 = vmatpush1.bf16.msra.mxu0 0
        %2288 = vmatprep.subr.bf16.mxu0 0
        %2289 = vmatpush1.bf16.msra.mxu0 0
        %2290 = vmatprep.subr.bf16.mxu0 0
        %2291 = vmatpush1.bf16.msra.mxu0 0
        %2292 = vmatprep.subr.bf16.mxu0 0
        %2293 = vmatpush1.bf16.msra.mxu0 0
        %2294 = vmatprep.subr.bf16.mxu0 0
        %2295 = vmatpush1.bf16.msra.mxu0 0
        %2296 = vmatprep.subr.bf16.mxu0 0
        %2297 = vmatpush1.bf16.msra.mxu0 0
        %2298 = vmatprep.mubr.bf16.mxu0 0
        %2299 = vmatmul.mubr.bf16.gmra.mrb[0].mxu0 %v2264
        %v2300 = vpop.f32.mrb[0].mxu0
        %v2301 = vadd.f32 %v2249, %v2300
        %v2302 = vpop.f32.mrb[0].mxu0
        %v2303 = vpop.f32.mrb[0].mxu0
        %v2304 = vpop.f32.mrb[0].mxu0
        %2305 = vdwg.mxu0
        %v2306 = vadd.f32 %v976, %v2301
        %v2307 = vld [vmem:[%s953] sm:$0x1]
        %v2308 = vld [vmem:[%s956] sm:$0x1]
        %v2309 = vsel %vm982, %v2306, 0.0
        %2310 = vadd.xlane.f32.xlu0 %v2309
        %v2311 = vpop.xlane.xlu0 %2310
        %v2312 = vmul.f32 %v2311, %v986
        %v2313 = vsub.f32 %v2306, %v2312
        %v2314 = vmul.f32 %v2313, %v2313
        %v2315 = vsel %vm982, %v2314, 0.0
        %2316 = vadd.xlane.f32.xlu0 %v2315
        %v2317 = vpop.xlane.xlu0 %2316
        %v2318 = vmul.f32 %v2317, %v986
        %v2319 = vadd.f32 %v2318, 1e-05
        %v2320 = vrsqrt.pop %v2319
        %v2321 = vmul.f32 %v2313, %v2320
        %v2323 = vlaneseq
        %v2324 = vshrl.u32 %v2323, 7
        %v2325 = vsub.s32 0, %v2324
        %v2326 = vrot.slane %v2307, %v2325
        %v2328 = vmul.f32 %v2321, %v2326
        %v2330 = vlaneseq
        %v2331 = vshrl.u32 %v2330, 7
        %v2332 = vsub.s32 0, %v2331
        %v2333 = vrot.slane %v2308, %v2332
        %v2335 = vadd.f32 %v2328, %v2333
        %v2336 = vpack.c.bf16 %v2335, %v2335
        %v2337 = vld [vmem:[%s795] sm:$0xf]
        %v2338 = vld [vmem:[%s795 + $0x4] sm:$0xf]
        %v2339 = vld [vmem:[%s795 + $0x8] sm:$0xf]
        %v2340 = vld [vmem:[%s795 + $0xc] sm:$0xf]
        %v2341 = vld [vmem:[%s959] sm:$0x1]
        %v2343 = vlaneseq
        %v2344 = vshrl.u32 %v2343, 7
        %v2345 = vsub.s32 0, %v2344
        %v2346 = vrot.slane %v2341, %v2345
        %v2352 = vunpack.c.l.b16 %v2337
        %v2353 = vunpack.c.l.b16 %v2338
        %v2354 = vunpack.c.l.b16 %v2339
        %v2355 = vunpack.c.l.b16 %v2340
        %v2356 = vpack.c.b16 %v2353, %v2352
        %v2357 = vpack.c.b16 %v2355, %v2354
        %v2361 = vsel %vm982, %v2336, 0
        %2363 = vmatprep.subr.bf16.mxu0 0
        %2364 = vmatpush1.bf16.msra.mxu0 %v2356
        %2365 = vmatprep.subr.bf16.mxu0 0
        %2366 = vmatpush1.bf16.msra.mxu0 %v2357
        %2367 = vmatprep.subr.bf16.mxu0 0
        %2368 = vmatpush1.bf16.msra.mxu0 0
        %2369 = vmatprep.subr.bf16.mxu0 0
        %2370 = vmatpush1.bf16.msra.mxu0 0
        %2371 = vmatprep.subr.bf16.mxu0 0
        %2372 = vmatpush1.bf16.msra.mxu0 0
        %2373 = vmatprep.subr.bf16.mxu0 0
        %2374 = vmatpush1.bf16.msra.mxu0 0
        %2375 = vmatprep.subr.bf16.mxu0 0
        %2376 = vmatpush1.bf16.msra.mxu0 0
        %2377 = vmatprep.subr.bf16.mxu0 0
        %2378 = vmatpush1.bf16.msra.mxu0 0
        %2379 = vmatprep.subr.bf16.mxu0 0
        %2380 = vmatpush1.bf16.msra.mxu0 0
        %2381 = vmatprep.subr.bf16.mxu0 0
        %2382 = vmatpush1.bf16.msra.mxu0 0
        %2383 = vmatprep.subr.bf16.mxu0 0
        %2384 = vmatpush1.bf16.msra.mxu0 0
        %2385 = vmatprep.subr.bf16.mxu0 0
        %2386 = vmatpush1.bf16.msra.mxu0 0
        %2387 = vmatprep.subr.bf16.mxu0 0
        %2388 = vmatpush1.bf16.msra.mxu0 0
        %2389 = vmatprep.subr.bf16.mxu0 0
        %2390 = vmatpush1.bf16.msra.mxu0 0
        %2391 = vmatprep.subr.bf16.mxu0 0
        %2392 = vmatpush1.bf16.msra.mxu0 0
        %2393 = vmatprep.subr.bf16.mxu0 0
        %2394 = vmatpush1.bf16.msra.mxu0 0
        %2395 = vmatprep.mubr.bf16.mxu0 0
        %2396 = vmatmul.mubr.bf16.gmra.mrb[0].mxu0 %v2361
        %v2397 = vpop.f32.mrb[0].mxu0
        %v2398 = vadd.f32 %v2346, %v2397
        %v2399 = vpop.f32.mrb[0].mxu0
        %v2400 = vpop.f32.mrb[0].mxu0
        %v2401 = vpop.f32.mrb[0].mxu0
        %2402 = vdwg.mxu0
        %v2403 = vmax.f32 %v2398, 0.0
        %v2404 = vpack.c.bf16 %v2403, %v2403
        %v2405 = vld [vmem:[%s964] sm:$0xf]
        %v2406 = vld [vmem:[%s964 + $0x4] sm:$0xf]
        %v2407 = vld [vmem:[%s964 + $0x8] sm:$0xf]
        %v2408 = vld [vmem:[%s964 + $0xc] sm:$0xf]
        %v2409 = vld [vmem:[%s964 + $0x10] sm:$0xf]
        %v2410 = vld [vmem:[%s964 + $0x14] sm:$0xf]
        %v2411 = vld [vmem:[%s964 + $0x18] sm:$0xf]
        %v2412 = vld [vmem:[%s964 + $0x1c] sm:$0xf]
        %v2413 = vld [vmem:[%s967] sm:$0x1]
        %v2415 = vlaneseq
        %v2416 = vshrl.u32 %v2415, 7
        %v2417 = vsub.s32 0, %v2416
        %v2418 = vrot.slane %v2413, %v2417
        %v2428 = vunpack.c.l.b16 %v2405
        %v2429 = vunpack.c.l.b16 %v2406
        %v2430 = vunpack.c.l.b16 %v2407
        %v2431 = vunpack.c.l.b16 %v2408
        %v2432 = vunpack.c.l.b16 %v2409
        %v2433 = vunpack.c.l.b16 %v2410
        %v2434 = vunpack.c.l.b16 %v2411
        %v2435 = vunpack.c.l.b16 %v2412
        %v2436 = vpack.c.b16 %v2429, %v2428
        %v2437 = vpack.c.b16 %v2431, %v2430
        %v2438 = vpack.c.b16 %v2433, %v2432
        %v2439 = vpack.c.b16 %v2435, %v2434
        %vm2444 = vcmask 523264
        %v2446 = vsel %vm2444, %v2404, 0
        %2448 = vmatprep.subr.bf16.mxu0 0
        %2449 = vmatpush1.bf16.msra.mxu0 %v2436
        %2450 = vmatprep.subr.bf16.mxu0 0
        %2451 = vmatpush1.bf16.msra.mxu0 %v2437
        %2452 = vmatprep.subr.bf16.mxu0 0
        %2453 = vmatpush1.bf16.msra.mxu0 %v2438
        %2454 = vmatprep.subr.bf16.mxu0 0
        %2455 = vmatpush1.bf16.msra.mxu0 %v2439
        %2456 = vmatprep.subr.bf16.mxu0 0
        %2457 = vmatpush1.bf16.msra.mxu0 0
        %2458 = vmatprep.subr.bf16.mxu0 0
        %2459 = vmatpush1.bf16.msra.mxu0 0
        %2460 = vmatprep.subr.bf16.mxu0 0
        %2461 = vmatpush1.bf16.msra.mxu0 0
        %2462 = vmatprep.subr.bf16.mxu0 0
        %2463 = vmatpush1.bf16.msra.mxu0 0
        %2464 = vmatprep.subr.bf16.mxu0 0
        %2465 = vmatpush1.bf16.msra.mxu0 0
        %2466 = vmatprep.subr.bf16.mxu0 0
        %2467 = vmatpush1.bf16.msra.mxu0 0
        %2468 = vmatprep.subr.bf16.mxu0 0
        %2469 = vmatpush1.bf16.msra.mxu0 0
        %2470 = vmatprep.subr.bf16.mxu0 0
        %2471 = vmatpush1.bf16.msra.mxu0 0
        %2472 = vmatprep.subr.bf16.mxu0 0
        %2473 = vmatpush1.bf16.msra.mxu0 0
        %2474 = vmatprep.subr.bf16.mxu0 0
        %2475 = vmatpush1.bf16.msra.mxu0 0
        %2476 = vmatprep.subr.bf16.mxu0 0
        %2477 = vmatpush1.bf16.msra.mxu0 0
        %2478 = vmatprep.subr.bf16.mxu0 0
        %2479 = vmatpush1.bf16.msra.mxu0 0
        %2480 = vmatprep.mubr.bf16.mxu0 0
        %2481 = vmatmul.mubr.bf16.gmra.mrb[0].mxu0 %v2446
        %v2482 = vpop.f32.mrb[0].mxu0
        %v2483 = vadd.f32 %v2418, %v2482
        %v2484 = vpop.f32.mrb[0].mxu0
        %v2485 = vpop.f32.mrb[0].mxu0
        %v2486 = vpop.f32.mrb[0].mxu0
        %2487 = vdwg.mxu0
        %v2488 = vadd.f32 %v2306, %v2483
        %2489 = vst.msk [vmem:[#allocation2] sm:$0xff] %vm982, %v2488
        %p2490 = scmp.eq.s32.totalorder %s45, 1
        // Predicated region
        $region117: #{tpu_custom_call.1} parent=99 // pred_check
          %p2491 = pneg %p2490
        $region118: #{tpu_custom_call.1} parent=99 // pred_check_branch
          %2493 = sbr.rel (%p2491) target = $region120
        $region119: #{tpu_custom_call.1} parent=99 // pred_region
          %v2494 = vld [vmem:[%s18] sm:$0x1]
          %v2495 = vld [vmem:[%s19] sm:$0x1]
          %v2496 = vsel %vm982, %v2488, 0.0
          %2497 = vadd.xlane.f32.xlu0 %v2496
          %v2498 = vpop.xlane.xlu0 %2497
          %v2499 = vmul.f32 %v2498, %v986
          %v2500 = vsub.f32 %v2488, %v2499
          %v2501 = vmul.f32 %v2500, %v2500
          %v2502 = vsel %vm982, %v2501, 0.0
          %2503 = vadd.xlane.f32.xlu0 %v2502
          %v2504 = vpop.xlane.xlu0 %2503
          %v2505 = vmul.f32 %v2504, %v986
          %v2506 = vadd.f32 %v2505, 1e-05
          %v2507 = vrsqrt.pop %v2506
          %v2508 = vmul.f32 %v2500, %v2507
          %v2510 = vlaneseq
          %v2511 = vshrl.u32 %v2510, 7
          %v2512 = vsub.s32 0, %v2511
          %v2513 = vrot.slane %v2494, %v2512
          %v2515 = vmul.f32 %v2508, %v2513
          %v2517 = vlaneseq
          %v2518 = vshrl.u32 %v2517, 7
          %v2519 = vsub.s32 0, %v2518
          %v2520 = vrot.slane %v2495, %v2519
          %v2522 = vadd.f32 %v2515, %v2520
          %2523 = vst.msk [vmem:[%s914] sm:$0xff] %vm982, %v2522
        $region120: #{tpu_custom_call.1} parent=99 // pred_fallthru
          _
        %s2524 = sand.u32 %s570, 1
        %s2525 = scalar_lea.sflag [#allocation5], %s2524
        %s2526 = sand.u32 %s570, 1
        %s2527 = smul.addr %s2526, 8
        %s2528 = scalar_lea.vmem [#allocation9], %s2527
        // Predicated region
        $region121: #{tpu_custom_call.1} parent=99 // pred_check
          %p2529 = pneg %p580
        $region122: #{tpu_custom_call.1} parent=99 // pred_check_branch
          %2531 = sbr.rel (%p2529) target = $region124
        $region123: #{tpu_custom_call.1} parent=99 // pred_region
          %s2533 = ssub.s32 128, 128
          %2534 = vsyncadd %s2525, %s2533
          %s2535 = smul.addr %s44, 128
          %s2536 = scalar_lea.hbm %s20, %s2535
          %s2538 = sshll.u32 %s2528, 4
          %s2539 = int_to_ptr.vmem [resolvable:$true] %s2538
          %2541 = dma.vmem_to_hbm [thread:$0]  %s2539, 128, %s2536, %s2525
        $region124: #{tpu_custom_call.1} parent=99 // pred_fallthru
          _
      $region100: #{tpu_custom_call.1} parent=5 // pred_fallthru
        _
      %p2542 = scmp.le.s32.totalorder 2, %s35
      // Predicated region
      $region125: #{tpu_custom_call.1} parent=5 // pred_check
        %p2543 = pneg %p2542
      $region126: #{tpu_custom_call.1} parent=5 // pred_check_branch
        %2545 = sbr.rel (%p2543) target = $region128
      $region127: #{tpu_custom_call.1} parent=5 // pred_region
        %s2546 = ssub.s32 %s35, 2
        // Predicated region
        $region129: #{tpu_custom_call.1} parent=127 // pred_check
          %p2547 = pneg %p586
        $region130: #{tpu_custom_call.1} parent=127 // pred_check_branch
          %2549 = sbr.rel (%p2547) target = $region132
        $region131: #{tpu_custom_call.1} parent=127 // pred_region
          %s2550 = sand.u32 %s571, 1
          %s2551 = scalar_lea.sflag [#allocation5], %s2550
          %s2552 = sand.u32 %s571, 1
          %s2553 = smul.addr %s2552, 8
          %s2554 = scalar_lea.vmem [#allocation9], %s2553
          %2555 = dma.done %s2551, 128
        $region132: #{tpu_custom_call.1} parent=127 // pred_fallthru
          _
      $region128: #{tpu_custom_call.1} parent=5 // pred_fallthru
        _
    $region6: #{tpu_custom_call.1} parent=1 // loop_footer
      %s39 = sadd.s32 1, %s35
    $region7: #{tpu_custom_call.1} parent=1 // loop_footer_branch
      %34 = sbr.rel target = $region3
    $region8: #{tpu_custom_call.1} parent=1 // loop_exit
      _
    %2556 = vsyncpa [#allocation4], 1
    %s2557 = scalar_lea.sflag [#allocation4], 1
    %2558 = vsyncpa %s2557, 1
    %2559 = vsyncpa [#allocation7], 1
    %s2560 = scalar_lea.sflag [#allocation7], 1
    %2561 = vsyncpa %s2560, 1
    %2562 = vsyncpa [#allocation5], 1
    %s2563 = scalar_lea.sflag [#allocation5], 1
    %2564 = vsyncpa %s2563, 1

</llo_original>
